<compile_context>
chip_gen: v5e
topology: v5e:2x2
jax: 0.10.0
libtpu: 0.0.40
codegen_flags: <defaults>
</compile_context>

<pallas_src>
import jax
import jax.numpy as jnp
from jax.experimental import pallas as pl
from jax.experimental.pallas import tpu as pltpu


def _block3_kernel(x_ref, w_ref, b_ref, o_ref):
    # x_ref / o_ref : (C, tile_L)   (batch dim squeezed by the BlockSpec)
    # w_ref         : (13, C, C)    rows 0..8 are the inner E1 weights *2
    # b_ref         : (13, C, 1)
    x = x_ref[...].astype(jnp.float32)
    x2 = x + x                       # 2*x, reused for level-0 and final skips
    u = x
    skip = x2                        # 2*u for the current outer level
    for i in range(3):               # three BasicBlock_2's
        v = u
        for j in range(3):           # three BasicBlock_1's inside each
            k = i * 3 + j
            # relu(E1(2v)) with the factor 2 pre-folded into w_ref[k]
            v = jnp.maximum(
                jnp.dot(w_ref[k], v, preferred_element_type=jnp.float32)
                + b_ref[k], 0.0)
        u = jnp.maximum(
            jnp.dot(w_ref[9 + i], v + skip,
                    preferred_element_type=jnp.float32)
            + b_ref[9 + i], 0.0)
        skip = u + u
    y = jnp.maximum(
        jnp.dot(w_ref[12], u + x2, preferred_element_type=jnp.float32)
        + b_ref[12], 0.0)
    o_ref[...] = y.astype(o_ref.dtype)


@jax.jit
def basic_block_3(x_ncl, w_all, b_all):
    """x_ncl: (B, C, L) float32 (PyTorch NCL).  Returns (B, C, L)."""
    B, C, L = x_ncl.shape
    # Lane-dense tiling along L; no divisibility requirement on the caller.
    lp = ((L + 127) // 128) * 128
    tile_l = min(lp, 1024)
    lp = ((lp + tile_l - 1) // tile_l) * tile_l
    xp = x_ncl if lp == L else jnp.pad(x_ncl, ((0, 0), (0, 0), (0, lp - L)))

    out = pl.pallas_call(
        _block3_kernel,
        out_shape=jax.ShapeDtypeStruct((B, C, lp), x_ncl.dtype),
        grid_spec=pltpu.PrefetchScalarGridSpec(
            num_scalar_prefetch=0,
            grid=(B, lp // tile_l),
            in_specs=[
                # (1, C, tile_L) block of x, leading batch dim squeezed.
                pl.BlockSpec((None, C, tile_l), lambda b, l: (b, 0, l)),
                # Packed weights / biases: constant block -> resident in VMEM.
                pl.BlockSpec((13, C, C), lambda b, l: (0, 0, 0)),
                pl.BlockSpec((13, C, 1), lambda b, l: (0, 0, 0)),
            ],
            out_specs=pl.BlockSpec((None, C, tile_l), lambda b, l: (b, 0, l)),
        ),
        compiler_params=pltpu.CompilerParams(
            dimension_semantics=("parallel", "parallel")),
        # TODO(synk): if C ever grows large, set vmem_limit_bytes and shrink
        # tile_l so resident weights + double-buffered tiles fit v7x's 64 MiB.
    )(xp, w_all, b_all)

    return out if lp == L else out[:, :, :L]


def _pack_params(w1, b1, w2, b2, w3, b3):
    """Pack (C_out, C_in) weights / (C,) biases into (13,C,C) and (13,C,1).

    Order: 0..8 inner E1 (pre-scaled by 2), 9..11 mid E2, 12 outer E3.
    """
    w_all = jnp.concatenate([2.0 * w1, w2, w3[None]], axis=0)
    b_all = jnp.concatenate([b1, b2, b3[None]], axis=0)[..., None]
    return w_all, b_all


def _reference(x_ncl, w1, b1, w2, b2, w3, b3):
    """Pure-JAX (NCL) reference of the derived forward semantics."""
    def conv1x1(x, w, b):            # y[n,o,l] = sum_i w[o,i] x[n,i,l] + b[o]
        return jnp.einsum("oi,nil->nol", w, x) + b[None, :, None]

    x = x_ncl
    u = x
    for i in range(3):
        v = u
        for j in range(3):
            k = i * 3 + j
            v = jax.nn.relu(conv1x1(2.0 * v, w1[k], b1[k]))
        u = jax.nn.relu(conv1x1(v + 2.0 * u, w2[i], b2[i]))
    return jax.nn.relu(conv1x1(u + 2.0 * x, w3, b3))


def _init_params(key, c):
    # PyTorch Conv1d default init U(-1/sqrt(fan_in), +); fan_in = c * 1.
    # Only the LIVE 1x1 `end` convs of BasicBlock_1/2/3 are materialized; the
    # convs of BasicBlock_0 are dead code in the forward pass and omitted.
    ks = jax.random.split(key, 6)
    bound = 1.0 / jnp.sqrt(c)
    w1 = jax.random.uniform(ks[0], (9, c, c), jnp.float32, -bound, bound)
    b1 = jax.random.uniform(ks[1], (9, c), jnp.float32, -bound, bound)
    w2 = jax.random.uniform(ks[2], (3, c, c), jnp.float32, -bound, bound)
    b2 = jax.random.uniform(ks[3], (3, c), jnp.float32, -bound, bound)
    w3 = jax.random.uniform(ks[4], (c, c), jnp.float32, -bound, bound)
    b3 = jax.random.uniform(ks[5], (c,), jnp.float32, -bound, bound)
    return w1, b1, w2, b2, w3, b3


if __name__ == "__main__":
    # Small but lane-friendly shapes: B=2, C=8, L=1000 positions (padded to
    # 1024 -> one lane-dense (8, 1024) tile per batch; grid=(2,1) keeps both
    # v7x TensorCores busy and exercises the padding path).
    B, C, L = 2, 8, 1000
    key = jax.random.PRNGKey(0)
    kx, kp = jax.random.split(key)
    x = jax.random.normal(kx, (B, C, L), jnp.float32)
    params = _init_params(kp, C)
    w_all, b_all = _pack_params(*params)

    out = basic_block_3(x, w_all, b_all)
    out = jax.block_until_ready(out)

    ref = _reference(x, *params)
    assert out.shape == (B, C, L)
    assert jnp.allclose(out, ref, atol=1e-4, rtol=1e-4), "mismatch vs reference"
    print("KERNEL_OK")
</pallas_src>

<mosaic_0001>
module attributes {stable_mosaic.version = 11 : i64} {
  func.func @_block3_kernel(%arg0: i32, %arg1: i32, %arg2: memref<1x8x1024xf32, #tpu.memory_space<vmem>>, %arg3: memref<13x8x8xf32, #tpu.memory_space<vmem>>, %arg4: memref<13x8x1xf32, #tpu.memory_space<vmem>>, %arg5: memref<1x8x1024xf32, #tpu.memory_space<vmem>>) attributes {dimension_semantics = [#tpu.dimension_semantics<parallel>, #tpu.dimension_semantics<parallel>], iteration_bounds = array<i64: 2, 1>, scalar_prefetch = 0 : i64, scratch_operands = 0 : i64, tpu.core_type = #tpu.core_type<tc>, window_params = [{transform_indices = @transform_0, window_bounds = array<i64: 1, 8, 1024>}, {pipeline_mode = #tpu.pipeline_mode<synchronous>, transform_indices = @transform_1, window_bounds = array<i64: 13, 8, 8>}, {pipeline_mode = #tpu.pipeline_mode<synchronous>, transform_indices = @transform_2, window_bounds = array<i64: 13, 8, 1>}, {transform_indices = @transform_3, window_bounds = array<i64: 1, 8, 1024>}]} {
    %c0 = arith.constant 0 : index
    %c0_0 = arith.constant 0 : index
    %c0_1 = arith.constant 0 : index
    %0 = vector.load %arg2[%c0, %c0_0, %c0_1] : memref<1x8x1024xf32, #tpu.memory_space<vmem>>, vector<1x8x1024xf32>
    %1 = vector.shape_cast %0 : vector<1x8x1024xf32> to vector<8x1024xf32>
    %2 = arith.addf %1, %1 : vector<8x1024xf32>
    %c0_2 = arith.constant 0 : index
    %c0_3 = arith.constant 0 : index
    %c0_4 = arith.constant 0 : index
    %3 = vector.load %arg3[%c0_2, %c0_3, %c0_4] : memref<13x8x8xf32, #tpu.memory_space<vmem>>, vector<1x8x8xf32>
    %4 = vector.shape_cast %3 : vector<1x8x8xf32> to vector<8x8xf32>
    %cst = arith.constant dense<0.000000e+00> : vector<8x1024xf32>
    %5 = tpu.matmul %4, %1, %cst {dimension_numbers = #tpu.dot_dimension_numbers<[1], [0], [0], [1], [0, 0, 1, 1], [], []>} : vector<8x8xf32>, vector<8x1024xf32>, vector<8x1024xf32> -> vector<8x1024xf32>
    %c0_5 = arith.constant 0 : index
    %c0_6 = arith.constant 0 : index
    %c0_7 = arith.constant 0 : index
    %6 = vector.load %arg4[%c0_5, %c0_6, %c0_7] : memref<13x8x1xf32, #tpu.memory_space<vmem>>, vector<1x8x1xf32>
    %7 = vector.shape_cast %6 : vector<1x8x1xf32> to vector<8x1xf32>
    %8 = vector.broadcast %7 : vector<8x1xf32> to vector<8x1024xf32>
    %9 = arith.addf %5, %8 : vector<8x1024xf32>
    %cst_8 = arith.constant 0.000000e+00 : f32
    %10 = vector.broadcast %cst_8 : f32 to vector<8x1024xf32>
    %11 = arith.maximumf %9, %10 : vector<8x1024xf32>
    %c1 = arith.constant 1 : index
    %c0_9 = arith.constant 0 : index
    %c0_10 = arith.constant 0 : index
    %12 = vector.load %arg3[%c1, %c0_9, %c0_10] : memref<13x8x8xf32, #tpu.memory_space<vmem>>, vector<1x8x8xf32>
    %13 = vector.shape_cast %12 : vector<1x8x8xf32> to vector<8x8xf32>
    %cst_11 = arith.constant dense<0.000000e+00> : vector<8x1024xf32>
    %14 = tpu.matmul %13, %11, %cst_11 {dimension_numbers = #tpu.dot_dimension_numbers<[1], [0], [0], [1], [0, 0, 1, 1], [], []>} : vector<8x8xf32>, vector<8x1024xf32>, vector<8x1024xf32> -> vector<8x1024xf32>
    %c1_12 = arith.constant 1 : index
    %c0_13 = arith.constant 0 : index
    %c0_14 = arith.constant 0 : index
    %15 = vector.load %arg4[%c1_12, %c0_13, %c0_14] : memref<13x8x1xf32, #tpu.memory_space<vmem>>, vector<1x8x1xf32>
    %16 = vector.shape_cast %15 : vector<1x8x1xf32> to vector<8x1xf32>
    %17 = vector.broadcast %16 : vector<8x1xf32> to vector<8x1024xf32>
    %18 = arith.addf %14, %17 : vector<8x1024xf32>
    %cst_15 = arith.constant 0.000000e+00 : f32
    %19 = vector.broadcast %cst_15 : f32 to vector<8x1024xf32>
    %20 = arith.maximumf %18, %19 : vector<8x1024xf32>
    %c2 = arith.constant 2 : index
    %c0_16 = arith.constant 0 : index
    %c0_17 = arith.constant 0 : index
    %21 = vector.load %arg3[%c2, %c0_16, %c0_17] : memref<13x8x8xf32, #tpu.memory_space<vmem>>, vector<1x8x8xf32>
    %22 = vector.shape_cast %21 : vector<1x8x8xf32> to vector<8x8xf32>
    %cst_18 = arith.constant dense<0.000000e+00> : vector<8x1024xf32>
    %23 = tpu.matmul %22, %20, %cst_18 {dimension_numbers = #tpu.dot_dimension_numbers<[1], [0], [0], [1], [0, 0, 1, 1], [], []>} : vector<8x8xf32>, vector<8x1024xf32>, vector<8x1024xf32> -> vector<8x1024xf32>
    %c2_19 = arith.constant 2 : index
    %c0_20 = arith.constant 0 : index
    %c0_21 = arith.constant 0 : index
    %24 = vector.load %arg4[%c2_19, %c0_20, %c0_21] : memref<13x8x1xf32, #tpu.memory_space<vmem>>, vector<1x8x1xf32>
    %25 = vector.shape_cast %24 : vector<1x8x1xf32> to vector<8x1xf32>
    %26 = vector.broadcast %25 : vector<8x1xf32> to vector<8x1024xf32>
    %27 = arith.addf %23, %26 : vector<8x1024xf32>
    %cst_22 = arith.constant 0.000000e+00 : f32
    %28 = vector.broadcast %cst_22 : f32 to vector<8x1024xf32>
    %29 = arith.maximumf %27, %28 : vector<8x1024xf32>
    %c9 = arith.constant 9 : index
    %c0_23 = arith.constant 0 : index
    %c0_24 = arith.constant 0 : index
    %30 = vector.load %arg3[%c9, %c0_23, %c0_24] : memref<13x8x8xf32, #tpu.memory_space<vmem>>, vector<1x8x8xf32>
    %31 = vector.shape_cast %30 : vector<1x8x8xf32> to vector<8x8xf32>
    %32 = arith.addf %29, %2 : vector<8x1024xf32>
    %cst_25 = arith.constant dense<0.000000e+00> : vector<8x1024xf32>
    %33 = tpu.matmul %31, %32, %cst_25 {dimension_numbers = #tpu.dot_dimension_numbers<[1], [0], [0], [1], [0, 0, 1, 1], [], []>} : vector<8x8xf32>, vector<8x1024xf32>, vector<8x1024xf32> -> vector<8x1024xf32>
    %c9_26 = arith.constant 9 : index
    %c0_27 = arith.constant 0 : index
    %c0_28 = arith.constant 0 : index
    %34 = vector.load %arg4[%c9_26, %c0_27, %c0_28] : memref<13x8x1xf32, #tpu.memory_space<vmem>>, vector<1x8x1xf32>
    %35 = vector.shape_cast %34 : vector<1x8x1xf32> to vector<8x1xf32>
    %36 = vector.broadcast %35 : vector<8x1xf32> to vector<8x1024xf32>
    %37 = arith.addf %33, %36 : vector<8x1024xf32>
    %cst_29 = arith.constant 0.000000e+00 : f32
    %38 = vector.broadcast %cst_29 : f32 to vector<8x1024xf32>
    %39 = arith.maximumf %37, %38 : vector<8x1024xf32>
    %40 = arith.addf %39, %39 : vector<8x1024xf32>
    %c3 = arith.constant 3 : index
    %c0_30 = arith.constant 0 : index
    %c0_31 = arith.constant 0 : index
    %41 = vector.load %arg3[%c3, %c0_30, %c0_31] : memref<13x8x8xf32, #tpu.memory_space<vmem>>, vector<1x8x8xf32>
    %42 = vector.shape_cast %41 : vector<1x8x8xf32> to vector<8x8xf32>
    %cst_32 = arith.constant dense<0.000000e+00> : vector<8x1024xf32>
    %43 = tpu.matmul %42, %39, %cst_32 {dimension_numbers = #tpu.dot_dimension_numbers<[1], [0], [0], [1], [0, 0, 1, 1], [], []>} : vector<8x8xf32>, vector<8x1024xf32>, vector<8x1024xf32> -> vector<8x1024xf32>
    %c3_33 = arith.constant 3 : index
    %c0_34 = arith.constant 0 : index
    %c0_35 = arith.constant 0 : index
    %44 = vector.load %arg4[%c3_33, %c0_34, %c0_35] : memref<13x8x1xf32, #tpu.memory_space<vmem>>, vector<1x8x1xf32>
    %45 = vector.shape_cast %44 : vector<1x8x1xf32> to vector<8x1xf32>
    %46 = vector.broadcast %45 : vector<8x1xf32> to vector<8x1024xf32>
    %47 = arith.addf %43, %46 : vector<8x1024xf32>
    %cst_36 = arith.constant 0.000000e+00 : f32
    %48 = vector.broadcast %cst_36 : f32 to vector<8x1024xf32>
    %49 = arith.maximumf %47, %48 : vector<8x1024xf32>
    %c4 = arith.constant 4 : index
    %c0_37 = arith.constant 0 : index
    %c0_38 = arith.constant 0 : index
    %50 = vector.load %arg3[%c4, %c0_37, %c0_38] : memref<13x8x8xf32, #tpu.memory_space<vmem>>, vector<1x8x8xf32>
    %51 = vector.shape_cast %50 : vector<1x8x8xf32> to vector<8x8xf32>
    %cst_39 = arith.constant dense<0.000000e+00> : vector<8x1024xf32>
    %52 = tpu.matmul %51, %49, %cst_39 {dimension_numbers = #tpu.dot_dimension_numbers<[1], [0], [0], [1], [0, 0, 1, 1], [], []>} : vector<8x8xf32>, vector<8x1024xf32>, vector<8x1024xf32> -> vector<8x1024xf32>
    %c4_40 = arith.constant 4 : index
    %c0_41 = arith.constant 0 : index
    %c0_42 = arith.constant 0 : index
    %53 = vector.load %arg4[%c4_40, %c0_41, %c0_42] : memref<13x8x1xf32, #tpu.memory_space<vmem>>, vector<1x8x1xf32>
    %54 = vector.shape_cast %53 : vector<1x8x1xf32> to vector<8x1xf32>
    %55 = vector.broadcast %54 : vector<8x1xf32> to vector<8x1024xf32>
    %56 = arith.addf %52, %55 : vector<8x1024xf32>
    %cst_43 = arith.constant 0.000000e+00 : f32
    %57 = vector.broadcast %cst_43 : f32 to vector<8x1024xf32>
    %58 = arith.maximumf %56, %57 : vector<8x1024xf32>
    %c5 = arith.constant 5 : index
    %c0_44 = arith.constant 0 : index
    %c0_45 = arith.constant 0 : index
    %59 = vector.load %arg3[%c5, %c0_44, %c0_45] : memref<13x8x8xf32, #tpu.memory_space<vmem>>, vector<1x8x8xf32>
    %60 = vector.shape_cast %59 : vector<1x8x8xf32> to vector<8x8xf32>
    %cst_46 = arith.constant dense<0.000000e+00> : vector<8x1024xf32>
    %61 = tpu.matmul %60, %58, %cst_46 {dimension_numbers = #tpu.dot_dimension_numbers<[1], [0], [0], [1], [0, 0, 1, 1], [], []>} : vector<8x8xf32>, vector<8x1024xf32>, vector<8x1024xf32> -> vector<8x1024xf32>
    %c5_47 = arith.constant 5 : index
    %c0_48 = arith.constant 0 : index
    %c0_49 = arith.constant 0 : index
    %62 = vector.load %arg4[%c5_47, %c0_48, %c0_49] : memref<13x8x1xf32, #tpu.memory_space<vmem>>, vector<1x8x1xf32>
    %63 = vector.shape_cast %62 : vector<1x8x1xf32> to vector<8x1xf32>
    %64 = vector.broadcast %63 : vector<8x1xf32> to vector<8x1024xf32>
    %65 = arith.addf %61, %64 : vector<8x1024xf32>
    %cst_50 = arith.constant 0.000000e+00 : f32
    %66 = vector.broadcast %cst_50 : f32 to vector<8x1024xf32>
    %67 = arith.maximumf %65, %66 : vector<8x1024xf32>
    %c10 = arith.constant 10 : index
    %c0_51 = arith.constant 0 : index
    %c0_52 = arith.constant 0 : index
    %68 = vector.load %arg3[%c10, %c0_51, %c0_52] : memref<13x8x8xf32, #tpu.memory_space<vmem>>, vector<1x8x8xf32>
    %69 = vector.shape_cast %68 : vector<1x8x8xf32> to vector<8x8xf32>
    %70 = arith.addf %67, %40 : vector<8x1024xf32>
    %cst_53 = arith.constant dense<0.000000e+00> : vector<8x1024xf32>
    %71 = tpu.matmul %69, %70, %cst_53 {dimension_numbers = #tpu.dot_dimension_numbers<[1], [0], [0], [1], [0, 0, 1, 1], [], []>} : vector<8x8xf32>, vector<8x1024xf32>, vector<8x1024xf32> -> vector<8x1024xf32>
    %c10_54 = arith.constant 10 : index
    %c0_55 = arith.constant 0 : index
    %c0_56 = arith.constant 0 : index
    %72 = vector.load %arg4[%c10_54, %c0_55, %c0_56] : memref<13x8x1xf32, #tpu.memory_space<vmem>>, vector<1x8x1xf32>
    %73 = vector.shape_cast %72 : vector<1x8x1xf32> to vector<8x1xf32>
    %74 = vector.broadcast %73 : vector<8x1xf32> to vector<8x1024xf32>
    %75 = arith.addf %71, %74 : vector<8x1024xf32>
    %cst_57 = arith.constant 0.000000e+00 : f32
    %76 = vector.broadcast %cst_57 : f32 to vector<8x1024xf32>
    %77 = arith.maximumf %75, %76 : vector<8x1024xf32>
    %78 = arith.addf %77, %77 : vector<8x1024xf32>
    %c6 = arith.constant 6 : index
    %c0_58 = arith.constant 0 : index
    %c0_59 = arith.constant 0 : index
    %79 = vector.load %arg3[%c6, %c0_58, %c0_59] : memref<13x8x8xf32, #tpu.memory_space<vmem>>, vector<1x8x8xf32>
    %80 = vector.shape_cast %79 : vector<1x8x8xf32> to vector<8x8xf32>
    %cst_60 = arith.constant dense<0.000000e+00> : vector<8x1024xf32>
    %81 = tpu.matmul %80, %77, %cst_60 {dimension_numbers = #tpu.dot_dimension_numbers<[1], [0], [0], [1], [0, 0, 1, 1], [], []>} : vector<8x8xf32>, vector<8x1024xf32>, vector<8x1024xf32> -> vector<8x1024xf32>
    %c6_61 = arith.constant 6 : index
    %c0_62 = arith.constant 0 : index
    %c0_63 = arith.constant 0 : index
    %82 = vector.load %arg4[%c6_61, %c0_62, %c0_63] : memref<13x8x1xf32, #tpu.memory_space<vmem>>, vector<1x8x1xf32>
    %83 = vector.shape_cast %82 : vector<1x8x1xf32> to vector<8x1xf32>
    %84 = vector.broadcast %83 : vector<8x1xf32> to vector<8x1024xf32>
    %85 = arith.addf %81, %84 : vector<8x1024xf32>
    %cst_64 = arith.constant 0.000000e+00 : f32
    %86 = vector.broadcast %cst_64 : f32 to vector<8x1024xf32>
    %87 = arith.maximumf %85, %86 : vector<8x1024xf32>
    %c7 = arith.constant 7 : index
    %c0_65 = arith.constant 0 : index
    %c0_66 = arith.constant 0 : index
    %88 = vector.load %arg3[%c7, %c0_65, %c0_66] : memref<13x8x8xf32, #tpu.memory_space<vmem>>, vector<1x8x8xf32>
    %89 = vector.shape_cast %88 : vector<1x8x8xf32> to vector<8x8xf32>
    %cst_67 = arith.constant dense<0.000000e+00> : vector<8x1024xf32>
    %90 = tpu.matmul %89, %87, %cst_67 {dimension_numbers = #tpu.dot_dimension_numbers<[1], [0], [0], [1], [0, 0, 1, 1], [], []>} : vector<8x8xf32>, vector<8x1024xf32>, vector<8x1024xf32> -> vector<8x1024xf32>
    %c7_68 = arith.constant 7 : index
    %c0_69 = arith.constant 0 : index
    %c0_70 = arith.constant 0 : index
    %91 = vector.load %arg4[%c7_68, %c0_69, %c0_70] : memref<13x8x1xf32, #tpu.memory_space<vmem>>, vector<1x8x1xf32>
    %92 = vector.shape_cast %91 : vector<1x8x1xf32> to vector<8x1xf32>
    %93 = vector.broadcast %92 : vector<8x1xf32> to vector<8x1024xf32>
    %94 = arith.addf %90, %93 : vector<8x1024xf32>
    %cst_71 = arith.constant 0.000000e+00 : f32
    %95 = vector.broadcast %cst_71 : f32 to vector<8x1024xf32>
    %96 = arith.maximumf %94, %95 : vector<8x1024xf32>
    %c8 = arith.constant 8 : index
    %c0_72 = arith.constant 0 : index
    %c0_73 = arith.constant 0 : index
    %97 = vector.load %arg3[%c8, %c0_72, %c0_73] : memref<13x8x8xf32, #tpu.memory_space<vmem>>, vector<1x8x8xf32>
    %98 = vector.shape_cast %97 : vector<1x8x8xf32> to vector<8x8xf32>
    %cst_74 = arith.constant dense<0.000000e+00> : vector<8x1024xf32>
    %99 = tpu.matmul %98, %96, %cst_74 {dimension_numbers = #tpu.dot_dimension_numbers<[1], [0], [0], [1], [0, 0, 1, 1], [], []>} : vector<8x8xf32>, vector<8x1024xf32>, vector<8x1024xf32> -> vector<8x1024xf32>
    %c8_75 = arith.constant 8 : index
    %c0_76 = arith.constant 0 : index
    %c0_77 = arith.constant 0 : index
    %100 = vector.load %arg4[%c8_75, %c0_76, %c0_77] : memref<13x8x1xf32, #tpu.memory_space<vmem>>, vector<1x8x1xf32>
    %101 = vector.shape_cast %100 : vector<1x8x1xf32> to vector<8x1xf32>
    %102 = vector.broadcast %101 : vector<8x1xf32> to vector<8x1024xf32>
    %103 = arith.addf %99, %102 : vector<8x1024xf32>
    %cst_78 = arith.constant 0.000000e+00 : f32
    %104 = vector.broadcast %cst_78 : f32 to vector<8x1024xf32>
    %105 = arith.maximumf %103, %104 : vector<8x1024xf32>
    %c11 = arith.constant 11 : index
    %c0_79 = arith.constant 0 : index
    %c0_80 = arith.constant 0 : index
    %106 = vector.load %arg3[%c11, %c0_79, %c0_80] : memref<13x8x8xf32, #tpu.memory_space<vmem>>, vector<1x8x8xf32>
    %107 = vector.shape_cast %106 : vector<1x8x8xf32> to vector<8x8xf32>
    %108 = arith.addf %105, %78 : vector<8x1024xf32>
    %cst_81 = arith.constant dense<0.000000e+00> : vector<8x1024xf32>
    %109 = tpu.matmul %107, %108, %cst_81 {dimension_numbers = #tpu.dot_dimension_numbers<[1], [0], [0], [1], [0, 0, 1, 1], [], []>} : vector<8x8xf32>, vector<8x1024xf32>, vector<8x1024xf32> -> vector<8x1024xf32>
    %c11_82 = arith.constant 11 : index
    %c0_83 = arith.constant 0 : index
    %c0_84 = arith.constant 0 : index
    %110 = vector.load %arg4[%c11_82, %c0_83, %c0_84] : memref<13x8x1xf32, #tpu.memory_space<vmem>>, vector<1x8x1xf32>
    %111 = vector.shape_cast %110 : vector<1x8x1xf32> to vector<8x1xf32>
    %112 = vector.broadcast %111 : vector<8x1xf32> to vector<8x1024xf32>
    %113 = arith.addf %109, %112 : vector<8x1024xf32>
    %cst_85 = arith.constant 0.000000e+00 : f32
    %114 = vector.broadcast %cst_85 : f32 to vector<8x1024xf32>
    %115 = arith.maximumf %113, %114 : vector<8x1024xf32>
    %c12 = arith.constant 12 : index
    %c0_86 = arith.constant 0 : index
    %c0_87 = arith.constant 0 : index
    %116 = vector.load %arg3[%c12, %c0_86, %c0_87] : memref<13x8x8xf32, #tpu.memory_space<vmem>>, vector<1x8x8xf32>
    %117 = vector.shape_cast %116 : vector<1x8x8xf32> to vector<8x8xf32>
    %118 = arith.addf %115, %2 : vector<8x1024xf32>
    %cst_88 = arith.constant dense<0.000000e+00> : vector<8x1024xf32>
    %119 = tpu.matmul %117, %118, %cst_88 {dimension_numbers = #tpu.dot_dimension_numbers<[1], [0], [0], [1], [0, 0, 1, 1], [], []>} : vector<8x8xf32>, vector<8x1024xf32>, vector<8x1024xf32> -> vector<8x1024xf32>
    %c12_89 = arith.constant 12 : index
    %c0_90 = arith.constant 0 : index
    %c0_91 = arith.constant 0 : index
    %120 = vector.load %arg4[%c12_89, %c0_90, %c0_91] : memref<13x8x1xf32, #tpu.memory_space<vmem>>, vector<1x8x1xf32>
    %121 = vector.shape_cast %120 : vector<1x8x1xf32> to vector<8x1xf32>
    %122 = vector.broadcast %121 : vector<8x1xf32> to vector<8x1024xf32>
    %123 = arith.addf %119, %122 : vector<8x1024xf32>
    %cst_92 = arith.constant 0.000000e+00 : f32
    %124 = vector.broadcast %cst_92 : f32 to vector<8x1024xf32>
    %125 = arith.maximumf %123, %124 : vector<8x1024xf32>
    %c0_93 = arith.constant 0 : index
    %c0_94 = arith.constant 0 : index
    %c0_95 = arith.constant 0 : index
    %126 = vector.load %arg5[%c0_93, %c0_94, %c0_95] : memref<1x8x1024xf32, #tpu.memory_space<vmem>>, vector<1x8x1024xf32>
    %127 = vector.shape_cast %126 : vector<1x8x1024xf32> to vector<8x1024xf32>
    %128 = vector.shape_cast %125 : vector<8x1024xf32> to vector<1x8x1024xf32>
    tpu.vector_store %arg5[%c0_93, %c0_94, %c0_95], %128 {strides = array<i32>} : memref<1x8x1024xf32, #tpu.memory_space<vmem>>, vector<1x8x1024xf32>,
    return
  }
  func.func @transform_0(%arg0: i32, %arg1: i32) -> (i32, i32, i32) {
    %c0_i32 = arith.constant 0 : i32
    %c0_i32_0 = arith.constant 0 : i32
    return %arg0, %c0_i32, %arg1 : i32, i32, i32
  }
  func.func @transform_1(%arg0: i32, %arg1: i32) -> (i32, i32, i32) {
    %c0_i32 = arith.constant 0 : i32
    %c0_i32_0 = arith.constant 0 : i32
    %c0_i32_1 = arith.constant 0 : i32
    %c0_i32_2 = arith.constant 0 : i32
    return %c0_i32, %c0_i32_0, %c0_i32_1 : i32, i32, i32
  }
  func.func @transform_2(%arg0: i32, %arg1: i32) -> (i32, i32, i32) {
    %c0_i32 = arith.constant 0 : i32
    %c0_i32_0 = arith.constant 0 : i32
    %c0_i32_1 = arith.constant 0 : i32
    %c0_i32_2 = arith.constant 0 : i32
    return %c0_i32, %c0_i32_0, %c0_i32_1 : i32, i32, i32
  }
  func.func @transform_3(%arg0: i32, %arg1: i32) -> (i32, i32, i32) {
    %c0_i32 = arith.constant 0 : i32
    %c0_i32_0 = arith.constant 0 : i32
    return %arg0, %c0_i32, %arg1 : i32, i32, i32
  }
}

</mosaic_0001>

<llo_original>
// kernel: basic_block_3.1
$region0: #{basic_block_3.1}
  #allocation0 [shape = 'u32[]', space=smem, size = 0x4, offset = 0x4, fixed_abs, tag = 'smem constant byte address 0x4 - core index']
  #allocation1 [shape = 'u32[72,128]{1,0:T(1,128)}', space=vmem, size = 0x9000, scoped, tag = 'internal scratch']
  %s0 = inlined_call_operand.vmem [shape: f32[2,8,1024], index: 0, kind: input, shape index: {}]
  %s1 = inlined_call_operand.vmem [shape: f32[13,8,8], index: 1, kind: input, shape index: {}]
  %s2 = inlined_call_operand.vmem [shape: f32[13,8,1], index: 2, kind: input, shape index: {}]
  %s3 = inlined_call_operand.hbm [shape: f32[2,8,1024], index: 3, kind: output, shape index: {}]
  %s4 = sld [smem:[#allocation0]]
  $region45: #{basic_block_3.1} parent=0
    _
  %s6 = ssub.s32 1, %s4
  %s7 = scalar_select 0, %s6, %s4
  $region1: #{basic_block_3.1} parent=0
    #allocation2 [shape = 'u8[65536]{0}', space=vmem, size = 0x10000, scoped, tag = 'output window, operand 0']
    #allocation3 [shape = 's32[2]{0}', space=sflag, size = 0x8, scoped, tag = 'scoped memory for basic_block_3.1']
    %8 = vsyncpa [#allocation3], 0
    %s9 = scalar_lea.sflag [#allocation3], 1
    %10 = vsyncpa %s9, 0
    loop: start=0, step=1, limit=4
    $region2: #{basic_block_3.1} parent=1 // loop_pre_header
      _
    $region3: #{basic_block_3.1} parent=1 // loop_header
      %s12 = sphi 0, %s16
      %p13 = scmp.ge.s32.totalorder %s12, 4
      %s19 = sphi 0, %s31
      %s20 = sphi 0, %s27
      %s21 = sphi 0, %s19
      %s22 = sphi 0, %s20
      %s23 = sphi 0, %s21
      %s24 = sphi 0, %s22
      %s36 = sphi 0, %s38
      %s39 = sphi 0, %s36
      %s40 = sphi 0, %s39
      %s56 = sphi 0, %s40
      %s60 = sphi 0, %s60
      %s62 = sphi 0, %s60
      %s63 = sphi 0, %s62
      %s77 = sphi 0, %s63
      %s81 = sphi 0, %s81
      %s83 = sphi 0, %s81
      %s84 = sphi 0, %s83
      %s98 = sphi 0, %s84
      %s106 = sphi 0, %s108
      %s109 = sphi 0, %s106
      %s110 = sphi 0, %s109
      %s126 = sphi 0, %s110
    $region4: #{basic_block_3.1} parent=1 // loop_header_branch
      %15 = sbr.rel (%p13) target = $region8
    $region5: #{basic_block_3.1} parent=1 // loop_body
      %s17 = ssub.s32 %s12, 1
      %s18 = ssub.s32 %s12, 2
      %s25 = sadd.s32 1, %s20
      %p26 = scmp.ge.s32.totalorder %s25, 1
      %s27 = scalar_select %p26, 0, %s25
      %s28 = sadd.s32 1, %s19
      %s29 = scalar_select %p26, %s28, %s19
      %p30 = scmp.ge.s32.totalorder %s29, 2
      %s31 = scalar_select %p30, 0, %s29
      %s32 = ssub.s32 %s19, %s31
      %s33 = ssub.s32 %s20, %s27
      %s34 = sor.u32 %s32, %s33
      %p35 = scmp.eq.s32.totalorder %s34, 0
      %s37 = sadd.s32 %s36, 1
      %s38 = scalar_select %p35, %s36, %s37
      %p41 = pneg %p35
      %p42 = scmp.eq.s32.totalorder %s12, 1
      %p43 = por %p41, %p42
      %p44 = scmp.ne.s32.totalorder %s36, %s39
      %p45 = scmp.eq.s32.totalorder %s12, 0
      %p46 = por %p44, %p45
      %p47 = scmp.ne.s32.totalorder %s36, %s39
      %p48 = scmp.eq.s32.totalorder %s17, 1
      %p49 = por %p47, %p48
      %p50 = scmp.ne.s32.totalorder %s39, %s40
      %p51 = scmp.eq.s32.totalorder %s17, 0
      %p52 = por %p50, %p51
      %p53 = scmp.ne.s32.totalorder %s39, %s40
      %p54 = scmp.eq.s32.totalorder %s18, 1
      %p55 = por %p53, %p54
      %p57 = scmp.ne.s32.totalorder %s40, %s56
      %p58 = scmp.eq.s32.totalorder %s18, 0
      %p59 = por %p57, %p58
      %s61 = sadd.s32 %s60, 1
      %p64 = scmp.eq.s32.totalorder %s12, 1
      %p65 = scmp.ne.s32.totalorder %s60, %s62
      %p66 = scmp.eq.s32.totalorder %s12, 0
      %p67 = por %p65, %p66
      %p68 = scmp.ne.s32.totalorder %s60, %s62
      %p69 = scmp.eq.s32.totalorder %s17, 1
      %p70 = por %p68, %p69
      %p71 = scmp.ne.s32.totalorder %s62, %s63
      %p72 = scmp.eq.s32.totalorder %s17, 0
      %p73 = por %p71, %p72
      %p74 = scmp.ne.s32.totalorder %s62, %s63
      %p75 = scmp.eq.s32.totalorder %s18, 1
      %p76 = por %p74, %p75
      %p78 = scmp.ne.s32.totalorder %s63, %s77
      %p79 = scmp.eq.s32.totalorder %s18, 0
      %p80 = por %p78, %p79
      %s82 = sadd.s32 %s81, 1
      %p85 = scmp.eq.s32.totalorder %s12, 1
      %p86 = scmp.ne.s32.totalorder %s81, %s83
      %p87 = scmp.eq.s32.totalorder %s12, 0
      %p88 = por %p86, %p87
      %p89 = scmp.ne.s32.totalorder %s81, %s83
      %p90 = scmp.eq.s32.totalorder %s17, 1
      %p91 = por %p89, %p90
      %p92 = scmp.ne.s32.totalorder %s83, %s84
      %p93 = scmp.eq.s32.totalorder %s17, 0
      %p94 = por %p92, %p93
      %p95 = scmp.ne.s32.totalorder %s83, %s84
      %p96 = scmp.eq.s32.totalorder %s18, 1
      %p97 = por %p95, %p96
      %p99 = scmp.ne.s32.totalorder %s84, %s98
      %p100 = scmp.eq.s32.totalorder %s18, 0
      %p101 = por %p99, %p100
      %s102 = ssub.s32 %s19, %s31
      %s103 = ssub.s32 %s20, %s27
      %s104 = sor.u32 %s102, %s103
      %p105 = scmp.eq.s32.totalorder %s104, 0
      %s107 = sadd.s32 %s106, 1
      %s108 = scalar_select %p105, %s106, %s107
      %p111 = pneg %p105
      %p112 = scmp.eq.s32.totalorder %s12, 1
      %p113 = por %p111, %p112
      %p114 = scmp.ne.s32.totalorder %s106, %s109
      %p115 = scmp.eq.s32.totalorder %s12, 0
      %p116 = por %p114, %p115
      %p117 = scmp.ne.s32.totalorder %s106, %s109
      %p118 = scmp.eq.s32.totalorder %s17, 1
      %p119 = por %p117, %p118
      %p120 = scmp.ne.s32.totalorder %s109, %s110
      %p121 = scmp.eq.s32.totalorder %s17, 0
      %p122 = por %p120, %p121
      %p123 = scmp.ne.s32.totalorder %s109, %s110
      %p124 = scmp.eq.s32.totalorder %s18, 1
      %p125 = por %p123, %p124
      %p127 = scmp.ne.s32.totalorder %s110, %s126
      %p128 = scmp.eq.s32.totalorder %s18, 0
      %p129 = por %p127, %p128
      %p130 = scmp.le.s32.totalorder 1, %s12
      %p131 = scmp.lt.s32.totalorder %s12, 3
      %p132 = pnand %p130, %p131
      %p133 = pneg %p132
      // Predicated region
      $region9: #{basic_block_3.1} parent=5 // pred_check
        _
      $region10: #{basic_block_3.1} parent=5 // pred_check_branch
        %135 = sbr.rel (%p132) target = $region12
      $region11: #{basic_block_3.1} parent=5 // pred_region
        %s136 = ssub.s32 %s12, 1
        // Predicated region
        $region13: #{basic_block_3.1} parent=11 // pred_check
          %p137 = pneg %p73
        $region14: #{basic_block_3.1} parent=11 // pred_check_branch
          %139 = sbr.rel (%p137) target = $region16
        $region15: #{basic_block_3.1} parent=11 // pred_region
          _
        $region16: #{basic_block_3.1} parent=11 // pred_fallthru
          _
        // Predicated region
        $region17: #{basic_block_3.1} parent=11 // pred_check
          %p140 = pneg %p94
        $region18: #{basic_block_3.1} parent=11 // pred_check_branch
          %142 = sbr.rel (%p140) target = $region20
        $region19: #{basic_block_3.1} parent=11 // pred_region
          _
        $region20: #{basic_block_3.1} parent=11 // pred_fallthru
          _
      $region12: #{basic_block_3.1} parent=5 // pred_fallthru
        _
      %p143 = scmp.lt.s32.totalorder %s12, 2
      // Predicated region
      $region21: #{basic_block_3.1} parent=5 // pred_check
        %p144 = pneg %p143
      $region22: #{basic_block_3.1} parent=5 // pred_check_branch
        %146 = sbr.rel (%p144) target = $region24
      $region23: #{basic_block_3.1} parent=5 // pred_region
        // Predicated region
        $region25: #{basic_block_3.1} parent=23 // pred_check
          %p147 = pneg %p46
        $region26: #{basic_block_3.1} parent=23 // pred_check_branch
          %149 = sbr.rel (%p147) target = $region28
        $region27: #{basic_block_3.1} parent=23 // pred_region
          %s150 = smul.u32 8, %s20
          %p151 = scmp.lt.s32.totalorder %s19, 1
          %s152 = scalar_select %p151, %s19, 1
          %p153 = scmp.lt.s32.totalorder %s150, 7
          %s154 = scalar_select %p153, %s150, 7
          %s155 = smul.addr %s152, 8
          %s156 = sadd.s32 %s154, %s155
          %s157 = smul.addr %s156, 8
          %s158 = scalar_lea.vmem %s0, %s157
          %s159 = smul.u32 8, %s20
        $region28: #{basic_block_3.1} parent=23 // pred_fallthru
          _
      $region24: #{basic_block_3.1} parent=5 // pred_fallthru
        _
      %p160 = scmp.le.s32.totalorder 1, %s12
      %p161 = scmp.lt.s32.totalorder %s12, 3
      %p162 = pnand %p160, %p161
      %p163 = pneg %p162
      // Predicated region
      $region29: #{basic_block_3.1} parent=5 // pred_check
        _
      $region30: #{basic_block_3.1} parent=5 // pred_check_branch
        %165 = sbr.rel (%p162) target = $region32
      $region31: #{basic_block_3.1} parent=5 // pred_region
        %s166 = ssub.s32 %s12, 1
        %s167 = smul.u32 8, %s22
        %p168 = scmp.lt.s32.totalorder %s21, 1
        %s169 = scalar_select %p168, %s21, 1
        %p170 = scmp.lt.s32.totalorder %s167, 7
        %s171 = scalar_select %p170, %s167, 7
        %s172 = smul.addr %s169, 8
        %s173 = sadd.s32 %s171, %s172
        %s174 = smul.addr %s173, 8
        %s175 = scalar_lea.vmem %s0, %s174
        %p176 = pneg %p52
        %p177 = pneg %p49
        %p178 = pneg %p73
        %p179 = pneg %p70
        %p180 = pneg %p94
        %p181 = pneg %p91
        %p182 = pneg %p122
        %p183 = pneg %p119
        %s184 = sand.u32 %s109, 1
        %s185 = scalar_lea.sflag [#allocation3], %s184
        %s186 = sand.u32 %s109, 1
        %s187 = smul.addr %s186, 64
        %s188 = scalar_lea.vmem [#allocation2], %s187
        %s189 = smul.u32 8, %s22
        %p190 = scmp.lt.s32.totalorder %s21, 1
        %s191 = scalar_select %p190, %s21, 1
        %p192 = scmp.lt.s32.totalorder %s189, 7
        %s193 = scalar_select %p192, %s189, 7
        %s194 = smul.addr %s191, 8
        %s195 = sadd.s32 %s193, %s194
        %s196 = smul.addr %s195, 8
        %s197 = scalar_lea.vmem %s0, %s196
        %s198 = smul.u32 8, %s22
        %s199 = smul.u32 8, %s22
        %v200 = vld [vmem:[%s197] sm:$0xff]
        %v201 = vld [vmem:[%s197 + $0x8] sm:$0xff]
        %v202 = vld [vmem:[%s197 + $0x10] sm:$0xff]
        %v203 = vld [vmem:[%s197 + $0x18] sm:$0xff]
        %v204 = vld [vmem:[%s197 + $0x20] sm:$0xff]
        %v205 = vld [vmem:[%s197 + $0x28] sm:$0xff]
        %v206 = vld [vmem:[%s197 + $0x30] sm:$0xff]
        %v207 = vld [vmem:[%s197 + $0x38] sm:$0xff]
        %v208 = vadd.f32 %v200, %v200
        %v209 = vadd.f32 %v201, %v201
        %v210 = vadd.f32 %v202, %v202
        %v211 = vadd.f32 %v203, %v203
        %v212 = vadd.f32 %v204, %v204
        %v213 = vadd.f32 %v205, %v205
        %v214 = vadd.f32 %v206, %v206
        %v215 = vadd.f32 %v207, %v207
        %v216 = vld [vmem:[%s1] sm:$0xff]
        %v217 = vld [vmem:[%s2] sm:$0xff]
        %219 = vset.pattern.permute.xlu0 0
        %220 = vperm.xlu0 %219, %v217
        %v221 = vpop.permute.xlu0 %220
        %vm223 = vcmask 64512
        %v225 = vsel %vm223, %v216, 0
        %227 = vmatpush.msra.mxu0 0.0
        %228 = vmatpush.msra.mxu0 0.0
        %229 = vmatpush.msra.mxu0 0.0
        %230 = vmatpush.msra.mxu0 0.0
        %231 = vmatpush.msra.mxu0 0.0
        %232 = vmatpush.msra.mxu0 0.0
        %233 = vmatpush.msra.mxu0 0.0
        %234 = vmatpush.msra.mxu0 0.0
        %235 = vmatpush.msra.mxu0 0.0
        %236 = vmatpush.msra.mxu0 0.0
        %237 = vmatpush.msra.mxu0 0.0
        %238 = vmatpush.msra.mxu0 0.0
        %239 = vmatpush.msra.mxu0 0.0
        %240 = vmatpush.msra.mxu0 0.0
        %241 = vmatpush.msra.mxu0 0.0
        %242 = vmatpush.msra.mxu0 %v200
        %243 = vmatmul.f32.gmra.mxu0 %v225
        %v244 = vpop.f32.mrf.mxu0
        %v245 = vadd.f32 %v221, %v244
        %246 = vdwg.mxu0
        %247 = vmatpush.msra.mxu0 0.0
        %248 = vmatpush.msra.mxu0 0.0
        %249 = vmatpush.msra.mxu0 0.0
        %250 = vmatpush.msra.mxu0 0.0
        %251 = vmatpush.msra.mxu0 0.0
        %252 = vmatpush.msra.mxu0 0.0
        %253 = vmatpush.msra.mxu0 0.0
        %254 = vmatpush.msra.mxu0 0.0
        %255 = vmatpush.msra.mxu0 0.0
        %256 = vmatpush.msra.mxu0 0.0
        %257 = vmatpush.msra.mxu0 0.0
        %258 = vmatpush.msra.mxu0 0.0
        %259 = vmatpush.msra.mxu0 0.0
        %260 = vmatpush.msra.mxu0 0.0
        %261 = vmatpush.msra.mxu0 0.0
        %262 = vmatpush.msra.mxu0 %v201
        %263 = vmatmul.f32.gmra.mxu0 %v225
        %v264 = vpop.f32.mrf.mxu0
        %v265 = vadd.f32 %v221, %v264
        %266 = vdwg.mxu0
        %267 = vmatpush.msra.mxu0 0.0
        %268 = vmatpush.msra.mxu0 0.0
        %269 = vmatpush.msra.mxu0 0.0
        %270 = vmatpush.msra.mxu0 0.0
        %271 = vmatpush.msra.mxu0 0.0
        %272 = vmatpush.msra.mxu0 0.0
        %273 = vmatpush.msra.mxu0 0.0
        %274 = vmatpush.msra.mxu0 0.0
        %275 = vmatpush.msra.mxu0 0.0
        %276 = vmatpush.msra.mxu0 0.0
        %277 = vmatpush.msra.mxu0 0.0
        %278 = vmatpush.msra.mxu0 0.0
        %279 = vmatpush.msra.mxu0 0.0
        %280 = vmatpush.msra.mxu0 0.0
        %281 = vmatpush.msra.mxu0 0.0
        %282 = vmatpush.msra.mxu0 %v202
        %283 = vmatmul.f32.gmra.mxu0 %v225
        %v284 = vpop.f32.mrf.mxu0
        %v285 = vadd.f32 %v221, %v284
        %286 = vdwg.mxu0
        %287 = vmatpush.msra.mxu0 0.0
        %288 = vmatpush.msra.mxu0 0.0
        %289 = vmatpush.msra.mxu0 0.0
        %290 = vmatpush.msra.mxu0 0.0
        %291 = vmatpush.msra.mxu0 0.0
        %292 = vmatpush.msra.mxu0 0.0
        %293 = vmatpush.msra.mxu0 0.0
        %294 = vmatpush.msra.mxu0 0.0
        %295 = vmatpush.msra.mxu0 0.0
        %296 = vmatpush.msra.mxu0 0.0
        %297 = vmatpush.msra.mxu0 0.0
        %298 = vmatpush.msra.mxu0 0.0
        %299 = vmatpush.msra.mxu0 0.0
        %300 = vmatpush.msra.mxu0 0.0
        %301 = vmatpush.msra.mxu0 0.0
        %302 = vmatpush.msra.mxu0 %v203
        %303 = vmatmul.f32.gmra.mxu0 %v225
        %v304 = vpop.f32.mrf.mxu0
        %v305 = vadd.f32 %v221, %v304
        %306 = vdwg.mxu0
        %307 = vmatpush.msra.mxu0 0.0
        %308 = vmatpush.msra.mxu0 0.0
        %309 = vmatpush.msra.mxu0 0.0
        %310 = vmatpush.msra.mxu0 0.0
        %311 = vmatpush.msra.mxu0 0.0
        %312 = vmatpush.msra.mxu0 0.0
        %313 = vmatpush.msra.mxu0 0.0
        %314 = vmatpush.msra.mxu0 0.0
        %315 = vmatpush.msra.mxu0 0.0
        %316 = vmatpush.msra.mxu0 0.0
        %317 = vmatpush.msra.mxu0 0.0
        %318 = vmatpush.msra.mxu0 0.0
        %319 = vmatpush.msra.mxu0 0.0
        %320 = vmatpush.msra.mxu0 0.0
        %321 = vmatpush.msra.mxu0 0.0
        %322 = vmatpush.msra.mxu0 %v204
        %323 = vmatmul.f32.gmra.mxu0 %v225
        %v324 = vpop.f32.mrf.mxu0
        %v325 = vadd.f32 %v221, %v324
        %326 = vdwg.mxu0
        %327 = vmatpush.msra.mxu0 0.0
        %328 = vmatpush.msra.mxu0 0.0
        %329 = vmatpush.msra.mxu0 0.0
        %330 = vmatpush.msra.mxu0 0.0
        %331 = vmatpush.msra.mxu0 0.0
        %332 = vmatpush.msra.mxu0 0.0
        %333 = vmatpush.msra.mxu0 0.0
        %334 = vmatpush.msra.mxu0 0.0
        %335 = vmatpush.msra.mxu0 0.0
        %336 = vmatpush.msra.mxu0 0.0
        %337 = vmatpush.msra.mxu0 0.0
        %338 = vmatpush.msra.mxu0 0.0
        %339 = vmatpush.msra.mxu0 0.0
        %340 = vmatpush.msra.mxu0 0.0
        %341 = vmatpush.msra.mxu0 0.0
        %342 = vmatpush.msra.mxu0 %v205
        %343 = vmatmul.f32.gmra.mxu0 %v225
        %v344 = vpop.f32.mrf.mxu0
        %v345 = vadd.f32 %v221, %v344
        %346 = vdwg.mxu0
        %347 = vmatpush.msra.mxu0 0.0
        %348 = vmatpush.msra.mxu0 0.0
        %349 = vmatpush.msra.mxu0 0.0
        %350 = vmatpush.msra.mxu0 0.0
        %351 = vmatpush.msra.mxu0 0.0
        %352 = vmatpush.msra.mxu0 0.0
        %353 = vmatpush.msra.mxu0 0.0
        %354 = vmatpush.msra.mxu0 0.0
        %355 = vmatpush.msra.mxu0 0.0
        %356 = vmatpush.msra.mxu0 0.0
        %357 = vmatpush.msra.mxu0 0.0
        %358 = vmatpush.msra.mxu0 0.0
        %359 = vmatpush.msra.mxu0 0.0
        %360 = vmatpush.msra.mxu0 0.0
        %361 = vmatpush.msra.mxu0 0.0
        %362 = vmatpush.msra.mxu0 %v206
        %363 = vmatmul.f32.gmra.mxu0 %v225
        %v364 = vpop.f32.mrf.mxu0
        %v365 = vadd.f32 %v221, %v364
        %366 = vdwg.mxu0
        %367 = vmatpush.msra.mxu0 0.0
        %368 = vmatpush.msra.mxu0 0.0
        %369 = vmatpush.msra.mxu0 0.0
        %370 = vmatpush.msra.mxu0 0.0
        %371 = vmatpush.msra.mxu0 0.0
        %372 = vmatpush.msra.mxu0 0.0
        %373 = vmatpush.msra.mxu0 0.0
        %374 = vmatpush.msra.mxu0 0.0
        %375 = vmatpush.msra.mxu0 0.0
        %376 = vmatpush.msra.mxu0 0.0
        %377 = vmatpush.msra.mxu0 0.0
        %378 = vmatpush.msra.mxu0 0.0
        %379 = vmatpush.msra.mxu0 0.0
        %380 = vmatpush.msra.mxu0 0.0
        %381 = vmatpush.msra.mxu0 0.0
        %382 = vmatpush.msra.mxu0 %v207
        %383 = vmatmul.f32.gmra.mxu0 %v225
        %v384 = vpop.f32.mrf.mxu0
        %v385 = vadd.f32 %v221, %v384
        %386 = vdwg.mxu0
        %v387 = vmax.f32 %v245, 0.0
        %v388 = vmax.f32 %v265, 0.0
        %v389 = vmax.f32 %v285, 0.0
        %v390 = vmax.f32 %v305, 0.0
        %v391 = vmax.f32 %v325, 0.0
        %v392 = vmax.f32 %v345, 0.0
        %v393 = vmax.f32 %v365, 0.0
        %v394 = vmax.f32 %v385, 0.0
        %s395 = scalar_lea.vmem %s1, 8
        %v396 = vld [vmem:[%s395] sm:$0xff]
        %s397 = scalar_lea.vmem %s2, 8
        %v398 = vld [vmem:[%s397] sm:$0xff]
        %400 = vset.pattern.permute.xlu0 0
        %401 = vperm.xlu0 %400, %v398
        %v402 = vpop.permute.xlu0 %401
        %v405 = vsel %vm223, %v396, 0
        %407 = vmatpush.msra.mxu0 0.0
        %408 = vmatpush.msra.mxu0 0.0
        %409 = vmatpush.msra.mxu0 0.0
        %410 = vmatpush.msra.mxu0 0.0
        %411 = vmatpush.msra.mxu0 0.0
        %412 = vmatpush.msra.mxu0 0.0
        %413 = vmatpush.msra.mxu0 0.0
        %414 = vmatpush.msra.mxu0 0.0
        %415 = vmatpush.msra.mxu0 0.0
        %416 = vmatpush.msra.mxu0 0.0
        %417 = vmatpush.msra.mxu0 0.0
        %418 = vmatpush.msra.mxu0 0.0
        %419 = vmatpush.msra.mxu0 0.0
        %420 = vmatpush.msra.mxu0 0.0
        %421 = vmatpush.msra.mxu0 0.0
        %422 = vmatpush.msra.mxu0 %v387
        %423 = vmatmul.f32.gmra.mxu0 %v405
        %v424 = vpop.f32.mrf.mxu0
        %v425 = vadd.f32 %v402, %v424
        %426 = vdwg.mxu0
        %427 = vmatpush.msra.mxu0 0.0
        %428 = vmatpush.msra.mxu0 0.0
        %429 = vmatpush.msra.mxu0 0.0
        %430 = vmatpush.msra.mxu0 0.0
        %431 = vmatpush.msra.mxu0 0.0
        %432 = vmatpush.msra.mxu0 0.0
        %433 = vmatpush.msra.mxu0 0.0
        %434 = vmatpush.msra.mxu0 0.0
        %435 = vmatpush.msra.mxu0 0.0
        %436 = vmatpush.msra.mxu0 0.0
        %437 = vmatpush.msra.mxu0 0.0
        %438 = vmatpush.msra.mxu0 0.0
        %439 = vmatpush.msra.mxu0 0.0
        %440 = vmatpush.msra.mxu0 0.0
        %441 = vmatpush.msra.mxu0 0.0
        %442 = vmatpush.msra.mxu0 %v388
        %443 = vmatmul.f32.gmra.mxu0 %v405
        %v444 = vpop.f32.mrf.mxu0
        %v445 = vadd.f32 %v402, %v444
        %446 = vdwg.mxu0
        %447 = vmatpush.msra.mxu0 0.0
        %448 = vmatpush.msra.mxu0 0.0
        %449 = vmatpush.msra.mxu0 0.0
        %450 = vmatpush.msra.mxu0 0.0
        %451 = vmatpush.msra.mxu0 0.0
        %452 = vmatpush.msra.mxu0 0.0
        %453 = vmatpush.msra.mxu0 0.0
        %454 = vmatpush.msra.mxu0 0.0
        %455 = vmatpush.msra.mxu0 0.0
        %456 = vmatpush.msra.mxu0 0.0
        %457 = vmatpush.msra.mxu0 0.0
        %458 = vmatpush.msra.mxu0 0.0
        %459 = vmatpush.msra.mxu0 0.0
        %460 = vmatpush.msra.mxu0 0.0
        %461 = vmatpush.msra.mxu0 0.0
        %462 = vmatpush.msra.mxu0 %v389
        %463 = vmatmul.f32.gmra.mxu0 %v405
        %v464 = vpop.f32.mrf.mxu0
        %v465 = vadd.f32 %v402, %v464
        %466 = vdwg.mxu0
        %467 = vmatpush.msra.mxu0 0.0
        %468 = vmatpush.msra.mxu0 0.0
        %469 = vmatpush.msra.mxu0 0.0
        %470 = vmatpush.msra.mxu0 0.0
        %471 = vmatpush.msra.mxu0 0.0
        %472 = vmatpush.msra.mxu0 0.0
        %473 = vmatpush.msra.mxu0 0.0
        %474 = vmatpush.msra.mxu0 0.0
        %475 = vmatpush.msra.mxu0 0.0
        %476 = vmatpush.msra.mxu0 0.0
        %477 = vmatpush.msra.mxu0 0.0
        %478 = vmatpush.msra.mxu0 0.0
        %479 = vmatpush.msra.mxu0 0.0
        %480 = vmatpush.msra.mxu0 0.0
        %481 = vmatpush.msra.mxu0 0.0
        %482 = vmatpush.msra.mxu0 %v390
        %483 = vmatmul.f32.gmra.mxu0 %v405
        %v484 = vpop.f32.mrf.mxu0
        %v485 = vadd.f32 %v402, %v484
        %486 = vdwg.mxu0
        %487 = vmatpush.msra.mxu0 0.0
        %488 = vmatpush.msra.mxu0 0.0
        %489 = vmatpush.msra.mxu0 0.0
        %490 = vmatpush.msra.mxu0 0.0
        %491 = vmatpush.msra.mxu0 0.0
        %492 = vmatpush.msra.mxu0 0.0
        %493 = vmatpush.msra.mxu0 0.0
        %494 = vmatpush.msra.mxu0 0.0
        %495 = vmatpush.msra.mxu0 0.0
        %496 = vmatpush.msra.mxu0 0.0
        %497 = vmatpush.msra.mxu0 0.0
        %498 = vmatpush.msra.mxu0 0.0
        %499 = vmatpush.msra.mxu0 0.0
        %500 = vmatpush.msra.mxu0 0.0
        %501 = vmatpush.msra.mxu0 0.0
        %502 = vmatpush.msra.mxu0 %v391
        %503 = vmatmul.f32.gmra.mxu0 %v405
        %v504 = vpop.f32.mrf.mxu0
        %v505 = vadd.f32 %v402, %v504
        %506 = vdwg.mxu0
        %507 = vmatpush.msra.mxu0 0.0
        %508 = vmatpush.msra.mxu0 0.0
        %509 = vmatpush.msra.mxu0 0.0
        %510 = vmatpush.msra.mxu0 0.0
        %511 = vmatpush.msra.mxu0 0.0
        %512 = vmatpush.msra.mxu0 0.0
        %513 = vmatpush.msra.mxu0 0.0
        %514 = vmatpush.msra.mxu0 0.0
        %515 = vmatpush.msra.mxu0 0.0
        %516 = vmatpush.msra.mxu0 0.0
        %517 = vmatpush.msra.mxu0 0.0
        %518 = vmatpush.msra.mxu0 0.0
        %519 = vmatpush.msra.mxu0 0.0
        %520 = vmatpush.msra.mxu0 0.0
        %521 = vmatpush.msra.mxu0 0.0
        %522 = vmatpush.msra.mxu0 %v392
        %523 = vmatmul.f32.gmra.mxu0 %v405
        %v524 = vpop.f32.mrf.mxu0
        %v525 = vadd.f32 %v402, %v524
        %526 = vdwg.mxu0
        %527 = vmatpush.msra.mxu0 0.0
        %528 = vmatpush.msra.mxu0 0.0
        %529 = vmatpush.msra.mxu0 0.0
        %530 = vmatpush.msra.mxu0 0.0
        %531 = vmatpush.msra.mxu0 0.0
        %532 = vmatpush.msra.mxu0 0.0
        %533 = vmatpush.msra.mxu0 0.0
        %534 = vmatpush.msra.mxu0 0.0
        %535 = vmatpush.msra.mxu0 0.0
        %536 = vmatpush.msra.mxu0 0.0
        %537 = vmatpush.msra.mxu0 0.0
        %538 = vmatpush.msra.mxu0 0.0
        %539 = vmatpush.msra.mxu0 0.0
        %540 = vmatpush.msra.mxu0 0.0
        %541 = vmatpush.msra.mxu0 0.0
        %542 = vmatpush.msra.mxu0 %v393
        %543 = vmatmul.f32.gmra.mxu0 %v405
        %v544 = vpop.f32.mrf.mxu0
        %v545 = vadd.f32 %v402, %v544
        %546 = vdwg.mxu0
        %547 = vmatpush.msra.mxu0 0.0
        %548 = vmatpush.msra.mxu0 0.0
        %549 = vmatpush.msra.mxu0 0.0
        %550 = vmatpush.msra.mxu0 0.0
        %551 = vmatpush.msra.mxu0 0.0
        %552 = vmatpush.msra.mxu0 0.0
        %553 = vmatpush.msra.mxu0 0.0
        %554 = vmatpush.msra.mxu0 0.0
        %555 = vmatpush.msra.mxu0 0.0
        %556 = vmatpush.msra.mxu0 0.0
        %557 = vmatpush.msra.mxu0 0.0
        %558 = vmatpush.msra.mxu0 0.0
        %559 = vmatpush.msra.mxu0 0.0
        %560 = vmatpush.msra.mxu0 0.0
        %561 = vmatpush.msra.mxu0 0.0
        %562 = vmatpush.msra.mxu0 %v394
        %563 = vmatmul.f32.gmra.mxu0 %v405
        %v564 = vpop.f32.mrf.mxu0
        %v565 = vadd.f32 %v402, %v564
        %566 = vdwg.mxu0
        %v567 = vmax.f32 %v425, 0.0
        %v568 = vmax.f32 %v445, 0.0
        %v569 = vmax.f32 %v465, 0.0
        %v570 = vmax.f32 %v485, 0.0
        %v571 = vmax.f32 %v505, 0.0
        %v572 = vmax.f32 %v525, 0.0
        %v573 = vmax.f32 %v545, 0.0
        %v574 = vmax.f32 %v565, 0.0
        %s575 = scalar_lea.vmem %s1, 16
        %v576 = vld [vmem:[%s575] sm:$0xff]
        %s577 = scalar_lea.vmem %s2, 16
        %v578 = vld [vmem:[%s577] sm:$0xff]
        %580 = vset.pattern.permute.xlu0 0
        %581 = vperm.xlu0 %580, %v578
        %v582 = vpop.permute.xlu0 %581
        %v585 = vsel %vm223, %v576, 0
        %587 = vmatpush.msra.mxu0 0.0
        %588 = vmatpush.msra.mxu0 0.0
        %589 = vmatpush.msra.mxu0 0.0
        %590 = vmatpush.msra.mxu0 0.0
        %591 = vmatpush.msra.mxu0 0.0
        %592 = vmatpush.msra.mxu0 0.0
        %593 = vmatpush.msra.mxu0 0.0
        %594 = vmatpush.msra.mxu0 0.0
        %595 = vmatpush.msra.mxu0 0.0
        %596 = vmatpush.msra.mxu0 0.0
        %597 = vmatpush.msra.mxu0 0.0
        %598 = vmatpush.msra.mxu0 0.0
        %599 = vmatpush.msra.mxu0 0.0
        %600 = vmatpush.msra.mxu0 0.0
        %601 = vmatpush.msra.mxu0 0.0
        %602 = vmatpush.msra.mxu0 %v567
        %603 = vmatmul.f32.gmra.mxu0 %v585
        %v604 = vpop.f32.mrf.mxu0
        %v605 = vadd.f32 %v582, %v604
        %606 = vdwg.mxu0
        %607 = vmatpush.msra.mxu0 0.0
        %608 = vmatpush.msra.mxu0 0.0
        %609 = vmatpush.msra.mxu0 0.0
        %610 = vmatpush.msra.mxu0 0.0
        %611 = vmatpush.msra.mxu0 0.0
        %612 = vmatpush.msra.mxu0 0.0
        %613 = vmatpush.msra.mxu0 0.0
        %614 = vmatpush.msra.mxu0 0.0
        %615 = vmatpush.msra.mxu0 0.0
        %616 = vmatpush.msra.mxu0 0.0
        %617 = vmatpush.msra.mxu0 0.0
        %618 = vmatpush.msra.mxu0 0.0
        %619 = vmatpush.msra.mxu0 0.0
        %620 = vmatpush.msra.mxu0 0.0
        %621 = vmatpush.msra.mxu0 0.0
        %622 = vmatpush.msra.mxu0 %v568
        %623 = vmatmul.f32.gmra.mxu0 %v585
        %v624 = vpop.f32.mrf.mxu0
        %v625 = vadd.f32 %v582, %v624
        %626 = vdwg.mxu0
        %627 = vmatpush.msra.mxu0 0.0
        %628 = vmatpush.msra.mxu0 0.0
        %629 = vmatpush.msra.mxu0 0.0
        %630 = vmatpush.msra.mxu0 0.0
        %631 = vmatpush.msra.mxu0 0.0
        %632 = vmatpush.msra.mxu0 0.0
        %633 = vmatpush.msra.mxu0 0.0
        %634 = vmatpush.msra.mxu0 0.0
        %635 = vmatpush.msra.mxu0 0.0
        %636 = vmatpush.msra.mxu0 0.0
        %637 = vmatpush.msra.mxu0 0.0
        %638 = vmatpush.msra.mxu0 0.0
        %639 = vmatpush.msra.mxu0 0.0
        %640 = vmatpush.msra.mxu0 0.0
        %641 = vmatpush.msra.mxu0 0.0
        %642 = vmatpush.msra.mxu0 %v569
        %643 = vmatmul.f32.gmra.mxu0 %v585
        %v644 = vpop.f32.mrf.mxu0
        %v645 = vadd.f32 %v582, %v644
        %646 = vdwg.mxu0
        %647 = vmatpush.msra.mxu0 0.0
        %648 = vmatpush.msra.mxu0 0.0
        %649 = vmatpush.msra.mxu0 0.0
        %650 = vmatpush.msra.mxu0 0.0
        %651 = vmatpush.msra.mxu0 0.0
        %652 = vmatpush.msra.mxu0 0.0
        %653 = vmatpush.msra.mxu0 0.0
        %654 = vmatpush.msra.mxu0 0.0
        %655 = vmatpush.msra.mxu0 0.0
        %656 = vmatpush.msra.mxu0 0.0
        %657 = vmatpush.msra.mxu0 0.0
        %658 = vmatpush.msra.mxu0 0.0
        %659 = vmatpush.msra.mxu0 0.0
        %660 = vmatpush.msra.mxu0 0.0
        %661 = vmatpush.msra.mxu0 0.0
        %662 = vmatpush.msra.mxu0 %v570
        %663 = vmatmul.f32.gmra.mxu0 %v585
        %v664 = vpop.f32.mrf.mxu0
        %v665 = vadd.f32 %v582, %v664
        %666 = vdwg.mxu0
        %667 = vmatpush.msra.mxu0 0.0
        %668 = vmatpush.msra.mxu0 0.0
        %669 = vmatpush.msra.mxu0 0.0
        %670 = vmatpush.msra.mxu0 0.0
        %671 = vmatpush.msra.mxu0 0.0
        %672 = vmatpush.msra.mxu0 0.0
        %673 = vmatpush.msra.mxu0 0.0
        %674 = vmatpush.msra.mxu0 0.0
        %675 = vmatpush.msra.mxu0 0.0
        %676 = vmatpush.msra.mxu0 0.0
        %677 = vmatpush.msra.mxu0 0.0
        %678 = vmatpush.msra.mxu0 0.0
        %679 = vmatpush.msra.mxu0 0.0
        %680 = vmatpush.msra.mxu0 0.0
        %681 = vmatpush.msra.mxu0 0.0
        %682 = vmatpush.msra.mxu0 %v571
        %683 = vmatmul.f32.gmra.mxu0 %v585
        %v684 = vpop.f32.mrf.mxu0
        %v685 = vadd.f32 %v582, %v684
        %686 = vdwg.mxu0
        %687 = vmatpush.msra.mxu0 0.0
        %688 = vmatpush.msra.mxu0 0.0
        %689 = vmatpush.msra.mxu0 0.0
        %690 = vmatpush.msra.mxu0 0.0
        %691 = vmatpush.msra.mxu0 0.0
        %692 = vmatpush.msra.mxu0 0.0
        %693 = vmatpush.msra.mxu0 0.0
        %694 = vmatpush.msra.mxu0 0.0
        %695 = vmatpush.msra.mxu0 0.0
        %696 = vmatpush.msra.mxu0 0.0
        %697 = vmatpush.msra.mxu0 0.0
        %698 = vmatpush.msra.mxu0 0.0
        %699 = vmatpush.msra.mxu0 0.0
        %700 = vmatpush.msra.mxu0 0.0
        %701 = vmatpush.msra.mxu0 0.0
        %702 = vmatpush.msra.mxu0 %v572
        %703 = vmatmul.f32.gmra.mxu0 %v585
        %v704 = vpop.f32.mrf.mxu0
        %v705 = vadd.f32 %v582, %v704
        %706 = vdwg.mxu0
        %707 = vmatpush.msra.mxu0 0.0
        %708 = vmatpush.msra.mxu0 0.0
        %709 = vmatpush.msra.mxu0 0.0
        %710 = vmatpush.msra.mxu0 0.0
        %711 = vmatpush.msra.mxu0 0.0
        %712 = vmatpush.msra.mxu0 0.0
        %713 = vmatpush.msra.mxu0 0.0
        %714 = vmatpush.msra.mxu0 0.0
        %715 = vmatpush.msra.mxu0 0.0
        %716 = vmatpush.msra.mxu0 0.0
        %717 = vmatpush.msra.mxu0 0.0
        %718 = vmatpush.msra.mxu0 0.0
        %719 = vmatpush.msra.mxu0 0.0
        %720 = vmatpush.msra.mxu0 0.0
        %721 = vmatpush.msra.mxu0 0.0
        %722 = vmatpush.msra.mxu0 %v573
        %723 = vmatmul.f32.gmra.mxu0 %v585
        %v724 = vpop.f32.mrf.mxu0
        %v725 = vadd.f32 %v582, %v724
        %726 = vdwg.mxu0
        %727 = vmatpush.msra.mxu0 0.0
        %728 = vmatpush.msra.mxu0 0.0
        %729 = vmatpush.msra.mxu0 0.0
        %730 = vmatpush.msra.mxu0 0.0
        %731 = vmatpush.msra.mxu0 0.0
        %732 = vmatpush.msra.mxu0 0.0
        %733 = vmatpush.msra.mxu0 0.0
        %734 = vmatpush.msra.mxu0 0.0
        %735 = vmatpush.msra.mxu0 0.0
        %736 = vmatpush.msra.mxu0 0.0
        %737 = vmatpush.msra.mxu0 0.0
        %738 = vmatpush.msra.mxu0 0.0
        %739 = vmatpush.msra.mxu0 0.0
        %740 = vmatpush.msra.mxu0 0.0
        %741 = vmatpush.msra.mxu0 0.0
        %742 = vmatpush.msra.mxu0 %v574
        %743 = vmatmul.f32.gmra.mxu0 %v585
        %v744 = vpop.f32.mrf.mxu0
        %v745 = vadd.f32 %v582, %v744
        %746 = vdwg.mxu0
        %v747 = vmax.f32 %v605, 0.0
        %v748 = vmax.f32 %v625, 0.0
        %v749 = vmax.f32 %v645, 0.0
        %v750 = vmax.f32 %v665, 0.0
        %v751 = vmax.f32 %v685, 0.0
        %v752 = vmax.f32 %v705, 0.0
        %v753 = vmax.f32 %v725, 0.0
        %v754 = vmax.f32 %v745, 0.0
        %s755 = scalar_lea.vmem %s1, 72
        %v756 = vld [vmem:[%s755] sm:$0xff]
        %v757 = vadd.f32 %v747, %v208
        %v758 = vadd.f32 %v748, %v209
        %v759 = vadd.f32 %v749, %v210
        %v760 = vadd.f32 %v750, %v211
        %v761 = vadd.f32 %v751, %v212
        %v762 = vadd.f32 %v752, %v213
        %v763 = vadd.f32 %v753, %v214
        %v764 = vadd.f32 %v754, %v215
        %s765 = scalar_lea.vmem %s2, 72
        %v766 = vld [vmem:[%s765] sm:$0xff]
        %768 = vset.pattern.permute.xlu0 0
        %769 = vperm.xlu0 %768, %v766
        %v770 = vpop.permute.xlu0 %769
        %v773 = vsel %vm223, %v756, 0
        %775 = vmatpush.msra.mxu0 0.0
        %776 = vmatpush.msra.mxu0 0.0
        %777 = vmatpush.msra.mxu0 0.0
        %778 = vmatpush.msra.mxu0 0.0
        %779 = vmatpush.msra.mxu0 0.0
        %780 = vmatpush.msra.mxu0 0.0
        %781 = vmatpush.msra.mxu0 0.0
        %782 = vmatpush.msra.mxu0 0.0
        %783 = vmatpush.msra.mxu0 0.0
        %784 = vmatpush.msra.mxu0 0.0
        %785 = vmatpush.msra.mxu0 0.0
        %786 = vmatpush.msra.mxu0 0.0
        %787 = vmatpush.msra.mxu0 0.0
        %788 = vmatpush.msra.mxu0 0.0
        %789 = vmatpush.msra.mxu0 0.0
        %790 = vmatpush.msra.mxu0 %v757
        %791 = vmatmul.f32.gmra.mxu0 %v773
        %v792 = vpop.f32.mrf.mxu0
        %v793 = vadd.f32 %v770, %v792
        %794 = vdwg.mxu0
        %795 = vmatpush.msra.mxu0 0.0
        %796 = vmatpush.msra.mxu0 0.0
        %797 = vmatpush.msra.mxu0 0.0
        %798 = vmatpush.msra.mxu0 0.0
        %799 = vmatpush.msra.mxu0 0.0
        %800 = vmatpush.msra.mxu0 0.0
        %801 = vmatpush.msra.mxu0 0.0
        %802 = vmatpush.msra.mxu0 0.0
        %803 = vmatpush.msra.mxu0 0.0
        %804 = vmatpush.msra.mxu0 0.0
        %805 = vmatpush.msra.mxu0 0.0
        %806 = vmatpush.msra.mxu0 0.0
        %807 = vmatpush.msra.mxu0 0.0
        %808 = vmatpush.msra.mxu0 0.0
        %809 = vmatpush.msra.mxu0 0.0
        %810 = vmatpush.msra.mxu0 %v758
        %811 = vmatmul.f32.gmra.mxu0 %v773
        %v812 = vpop.f32.mrf.mxu0
        %v813 = vadd.f32 %v770, %v812
        %814 = vdwg.mxu0
        %815 = vmatpush.msra.mxu0 0.0
        %816 = vmatpush.msra.mxu0 0.0
        %817 = vmatpush.msra.mxu0 0.0
        %818 = vmatpush.msra.mxu0 0.0
        %819 = vmatpush.msra.mxu0 0.0
        %820 = vmatpush.msra.mxu0 0.0
        %821 = vmatpush.msra.mxu0 0.0
        %822 = vmatpush.msra.mxu0 0.0
        %823 = vmatpush.msra.mxu0 0.0
        %824 = vmatpush.msra.mxu0 0.0
        %825 = vmatpush.msra.mxu0 0.0
        %826 = vmatpush.msra.mxu0 0.0
        %827 = vmatpush.msra.mxu0 0.0
        %828 = vmatpush.msra.mxu0 0.0
        %829 = vmatpush.msra.mxu0 0.0
        %830 = vmatpush.msra.mxu0 %v759
        %831 = vmatmul.f32.gmra.mxu0 %v773
        %v832 = vpop.f32.mrf.mxu0
        %v833 = vadd.f32 %v770, %v832
        %834 = vdwg.mxu0
        %835 = vmatpush.msra.mxu0 0.0
        %836 = vmatpush.msra.mxu0 0.0
        %837 = vmatpush.msra.mxu0 0.0
        %838 = vmatpush.msra.mxu0 0.0
        %839 = vmatpush.msra.mxu0 0.0
        %840 = vmatpush.msra.mxu0 0.0
        %841 = vmatpush.msra.mxu0 0.0
        %842 = vmatpush.msra.mxu0 0.0
        %843 = vmatpush.msra.mxu0 0.0
        %844 = vmatpush.msra.mxu0 0.0
        %845 = vmatpush.msra.mxu0 0.0
        %846 = vmatpush.msra.mxu0 0.0
        %847 = vmatpush.msra.mxu0 0.0
        %848 = vmatpush.msra.mxu0 0.0
        %849 = vmatpush.msra.mxu0 0.0
        %850 = vmatpush.msra.mxu0 %v760
        %851 = vmatmul.f32.gmra.mxu0 %v773
        %v852 = vpop.f32.mrf.mxu0
        %v853 = vadd.f32 %v770, %v852
        %854 = vdwg.mxu0
        %855 = vmatpush.msra.mxu0 0.0
        %856 = vmatpush.msra.mxu0 0.0
        %857 = vmatpush.msra.mxu0 0.0
        %858 = vmatpush.msra.mxu0 0.0
        %859 = vmatpush.msra.mxu0 0.0
        %860 = vmatpush.msra.mxu0 0.0
        %861 = vmatpush.msra.mxu0 0.0
        %862 = vmatpush.msra.mxu0 0.0
        %863 = vmatpush.msra.mxu0 0.0
        %864 = vmatpush.msra.mxu0 0.0
        %865 = vmatpush.msra.mxu0 0.0
        %866 = vmatpush.msra.mxu0 0.0
        %867 = vmatpush.msra.mxu0 0.0
        %868 = vmatpush.msra.mxu0 0.0
        %869 = vmatpush.msra.mxu0 0.0
        %870 = vmatpush.msra.mxu0 %v761
        %871 = vmatmul.f32.gmra.mxu0 %v773
        %v872 = vpop.f32.mrf.mxu0
        %v873 = vadd.f32 %v770, %v872
        %874 = vdwg.mxu0
        %875 = vmatpush.msra.mxu0 0.0
        %876 = vmatpush.msra.mxu0 0.0
        %877 = vmatpush.msra.mxu0 0.0
        %878 = vmatpush.msra.mxu0 0.0
        %879 = vmatpush.msra.mxu0 0.0
        %880 = vmatpush.msra.mxu0 0.0
        %881 = vmatpush.msra.mxu0 0.0
        %882 = vmatpush.msra.mxu0 0.0
        %883 = vmatpush.msra.mxu0 0.0
        %884 = vmatpush.msra.mxu0 0.0
        %885 = vmatpush.msra.mxu0 0.0
        %886 = vmatpush.msra.mxu0 0.0
        %887 = vmatpush.msra.mxu0 0.0
        %888 = vmatpush.msra.mxu0 0.0
        %889 = vmatpush.msra.mxu0 0.0
        %890 = vmatpush.msra.mxu0 %v762
        %891 = vmatmul.f32.gmra.mxu0 %v773
        %v892 = vpop.f32.mrf.mxu0
        %v893 = vadd.f32 %v770, %v892
        %894 = vdwg.mxu0
        %895 = vmatpush.msra.mxu0 0.0
        %896 = vmatpush.msra.mxu0 0.0
        %897 = vmatpush.msra.mxu0 0.0
        %898 = vmatpush.msra.mxu0 0.0
        %899 = vmatpush.msra.mxu0 0.0
        %900 = vmatpush.msra.mxu0 0.0
        %901 = vmatpush.msra.mxu0 0.0
        %902 = vmatpush.msra.mxu0 0.0
        %903 = vmatpush.msra.mxu0 0.0
        %904 = vmatpush.msra.mxu0 0.0
        %905 = vmatpush.msra.mxu0 0.0
        %906 = vmatpush.msra.mxu0 0.0
        %907 = vmatpush.msra.mxu0 0.0
        %908 = vmatpush.msra.mxu0 0.0
        %909 = vmatpush.msra.mxu0 0.0
        %910 = vmatpush.msra.mxu0 %v763
        %911 = vmatmul.f32.gmra.mxu0 %v773
        %v912 = vpop.f32.mrf.mxu0
        %v913 = vadd.f32 %v770, %v912
        %914 = vdwg.mxu0
        %915 = vmatpush.msra.mxu0 0.0
        %916 = vmatpush.msra.mxu0 0.0
        %917 = vmatpush.msra.mxu0 0.0
        %918 = vmatpush.msra.mxu0 0.0
        %919 = vmatpush.msra.mxu0 0.0
        %920 = vmatpush.msra.mxu0 0.0
        %921 = vmatpush.msra.mxu0 0.0
        %922 = vmatpush.msra.mxu0 0.0
        %923 = vmatpush.msra.mxu0 0.0
        %924 = vmatpush.msra.mxu0 0.0
        %925 = vmatpush.msra.mxu0 0.0
        %926 = vmatpush.msra.mxu0 0.0
        %927 = vmatpush.msra.mxu0 0.0
        %928 = vmatpush.msra.mxu0 0.0
        %929 = vmatpush.msra.mxu0 0.0
        %930 = vmatpush.msra.mxu0 %v764
        %931 = vmatmul.f32.gmra.mxu0 %v773
        %v932 = vpop.f32.mrf.mxu0
        %v933 = vadd.f32 %v770, %v932
        %934 = vdwg.mxu0
        %v935 = vmax.f32 %v793, 0.0
        %v936 = vmax.f32 %v813, 0.0
        %v937 = vmax.f32 %v833, 0.0
        %v938 = vmax.f32 %v853, 0.0
        %v939 = vmax.f32 %v873, 0.0
        %v940 = vmax.f32 %v893, 0.0
        %v941 = vmax.f32 %v913, 0.0
        %v942 = vmax.f32 %v933, 0.0
        %v943 = vadd.f32 %v935, %v935
        %v944 = vadd.f32 %v936, %v936
        %v945 = vadd.f32 %v937, %v937
        %v946 = vadd.f32 %v938, %v938
        %v947 = vadd.f32 %v939, %v939
        %v948 = vadd.f32 %v940, %v940
        %v949 = vadd.f32 %v941, %v941
        %v950 = vadd.f32 %v942, %v942
        %s951 = scalar_lea.vmem %s1, 24
        %v952 = vld [vmem:[%s951] sm:$0xff]
        %s953 = scalar_lea.vmem %s2, 24
        %v954 = vld [vmem:[%s953] sm:$0xff]
        %956 = vset.pattern.permute.xlu0 0
        %957 = vperm.xlu0 %956, %v954
        %v958 = vpop.permute.xlu0 %957
        %v961 = vsel %vm223, %v952, 0
        %963 = vmatpush.msra.mxu0 0.0
        %964 = vmatpush.msra.mxu0 0.0
        %965 = vmatpush.msra.mxu0 0.0
        %966 = vmatpush.msra.mxu0 0.0
        %967 = vmatpush.msra.mxu0 0.0
        %968 = vmatpush.msra.mxu0 0.0
        %969 = vmatpush.msra.mxu0 0.0
        %970 = vmatpush.msra.mxu0 0.0
        %971 = vmatpush.msra.mxu0 0.0
        %972 = vmatpush.msra.mxu0 0.0
        %973 = vmatpush.msra.mxu0 0.0
        %974 = vmatpush.msra.mxu0 0.0
        %975 = vmatpush.msra.mxu0 0.0
        %976 = vmatpush.msra.mxu0 0.0
        %977 = vmatpush.msra.mxu0 0.0
        %978 = vmatpush.msra.mxu0 %v935
        %979 = vmatmul.f32.gmra.mxu0 %v961
        %v980 = vpop.f32.mrf.mxu0
        %v981 = vadd.f32 %v958, %v980
        %982 = vdwg.mxu0
        %983 = vmatpush.msra.mxu0 0.0
        %984 = vmatpush.msra.mxu0 0.0
        %985 = vmatpush.msra.mxu0 0.0
        %986 = vmatpush.msra.mxu0 0.0
        %987 = vmatpush.msra.mxu0 0.0
        %988 = vmatpush.msra.mxu0 0.0
        %989 = vmatpush.msra.mxu0 0.0
        %990 = vmatpush.msra.mxu0 0.0
        %991 = vmatpush.msra.mxu0 0.0
        %992 = vmatpush.msra.mxu0 0.0
        %993 = vmatpush.msra.mxu0 0.0
        %994 = vmatpush.msra.mxu0 0.0
        %995 = vmatpush.msra.mxu0 0.0
        %996 = vmatpush.msra.mxu0 0.0
        %997 = vmatpush.msra.mxu0 0.0
        %998 = vmatpush.msra.mxu0 %v936
        %999 = vmatmul.f32.gmra.mxu0 %v961
        %v1000 = vpop.f32.mrf.mxu0
        %v1001 = vadd.f32 %v958, %v1000
        %1002 = vdwg.mxu0
        %1003 = vmatpush.msra.mxu0 0.0
        %1004 = vmatpush.msra.mxu0 0.0
        %1005 = vmatpush.msra.mxu0 0.0
        %1006 = vmatpush.msra.mxu0 0.0
        %1007 = vmatpush.msra.mxu0 0.0
        %1008 = vmatpush.msra.mxu0 0.0
        %1009 = vmatpush.msra.mxu0 0.0
        %1010 = vmatpush.msra.mxu0 0.0
        %1011 = vmatpush.msra.mxu0 0.0
        %1012 = vmatpush.msra.mxu0 0.0
        %1013 = vmatpush.msra.mxu0 0.0
        %1014 = vmatpush.msra.mxu0 0.0
        %1015 = vmatpush.msra.mxu0 0.0
        %1016 = vmatpush.msra.mxu0 0.0
        %1017 = vmatpush.msra.mxu0 0.0
        %1018 = vmatpush.msra.mxu0 %v937
        %1019 = vmatmul.f32.gmra.mxu0 %v961
        %v1020 = vpop.f32.mrf.mxu0
        %v1021 = vadd.f32 %v958, %v1020
        %1022 = vdwg.mxu0
        %1023 = vmatpush.msra.mxu0 0.0
        %1024 = vmatpush.msra.mxu0 0.0
        %1025 = vmatpush.msra.mxu0 0.0
        %1026 = vmatpush.msra.mxu0 0.0
        %1027 = vmatpush.msra.mxu0 0.0
        %1028 = vmatpush.msra.mxu0 0.0
        %1029 = vmatpush.msra.mxu0 0.0
        %1030 = vmatpush.msra.mxu0 0.0
        %1031 = vmatpush.msra.mxu0 0.0
        %1032 = vmatpush.msra.mxu0 0.0
        %1033 = vmatpush.msra.mxu0 0.0
        %1034 = vmatpush.msra.mxu0 0.0
        %1035 = vmatpush.msra.mxu0 0.0
        %1036 = vmatpush.msra.mxu0 0.0
        %1037 = vmatpush.msra.mxu0 0.0
        %1038 = vmatpush.msra.mxu0 %v938
        %1039 = vmatmul.f32.gmra.mxu0 %v961
        %v1040 = vpop.f32.mrf.mxu0
        %v1041 = vadd.f32 %v958, %v1040
        %1042 = vdwg.mxu0
        %1043 = vmatpush.msra.mxu0 0.0
        %1044 = vmatpush.msra.mxu0 0.0
        %1045 = vmatpush.msra.mxu0 0.0
        %1046 = vmatpush.msra.mxu0 0.0
        %1047 = vmatpush.msra.mxu0 0.0
        %1048 = vmatpush.msra.mxu0 0.0
        %1049 = vmatpush.msra.mxu0 0.0
        %1050 = vmatpush.msra.mxu0 0.0
        %1051 = vmatpush.msra.mxu0 0.0
        %1052 = vmatpush.msra.mxu0 0.0
        %1053 = vmatpush.msra.mxu0 0.0
        %1054 = vmatpush.msra.mxu0 0.0
        %1055 = vmatpush.msra.mxu0 0.0
        %1056 = vmatpush.msra.mxu0 0.0
        %1057 = vmatpush.msra.mxu0 0.0
        %1058 = vmatpush.msra.mxu0 %v939
        %1059 = vmatmul.f32.gmra.mxu0 %v961
        %v1060 = vpop.f32.mrf.mxu0
        %v1061 = vadd.f32 %v958, %v1060
        %1062 = vdwg.mxu0
        %1063 = vmatpush.msra.mxu0 0.0
        %1064 = vmatpush.msra.mxu0 0.0
        %1065 = vmatpush.msra.mxu0 0.0
        %1066 = vmatpush.msra.mxu0 0.0
        %1067 = vmatpush.msra.mxu0 0.0
        %1068 = vmatpush.msra.mxu0 0.0
        %1069 = vmatpush.msra.mxu0 0.0
        %1070 = vmatpush.msra.mxu0 0.0
        %1071 = vmatpush.msra.mxu0 0.0
        %1072 = vmatpush.msra.mxu0 0.0
        %1073 = vmatpush.msra.mxu0 0.0
        %1074 = vmatpush.msra.mxu0 0.0
        %1075 = vmatpush.msra.mxu0 0.0
        %1076 = vmatpush.msra.mxu0 0.0
        %1077 = vmatpush.msra.mxu0 0.0
        %1078 = vmatpush.msra.mxu0 %v940
        %1079 = vmatmul.f32.gmra.mxu0 %v961
        %v1080 = vpop.f32.mrf.mxu0
        %v1081 = vadd.f32 %v958, %v1080
        %1082 = vdwg.mxu0
        %1083 = vmatpush.msra.mxu0 0.0
        %1084 = vmatpush.msra.mxu0 0.0
        %1085 = vmatpush.msra.mxu0 0.0
        %1086 = vmatpush.msra.mxu0 0.0
        %1087 = vmatpush.msra.mxu0 0.0
        %1088 = vmatpush.msra.mxu0 0.0
        %1089 = vmatpush.msra.mxu0 0.0
        %1090 = vmatpush.msra.mxu0 0.0
        %1091 = vmatpush.msra.mxu0 0.0
        %1092 = vmatpush.msra.mxu0 0.0
        %1093 = vmatpush.msra.mxu0 0.0
        %1094 = vmatpush.msra.mxu0 0.0
        %1095 = vmatpush.msra.mxu0 0.0
        %1096 = vmatpush.msra.mxu0 0.0
        %1097 = vmatpush.msra.mxu0 0.0
        %1098 = vmatpush.msra.mxu0 %v941
        %1099 = vmatmul.f32.gmra.mxu0 %v961
        %v1100 = vpop.f32.mrf.mxu0
        %v1101 = vadd.f32 %v958, %v1100
        %1102 = vdwg.mxu0
        %1103 = vmatpush.msra.mxu0 0.0
        %1104 = vmatpush.msra.mxu0 0.0
        %1105 = vmatpush.msra.mxu0 0.0
        %1106 = vmatpush.msra.mxu0 0.0
        %1107 = vmatpush.msra.mxu0 0.0
        %1108 = vmatpush.msra.mxu0 0.0
        %1109 = vmatpush.msra.mxu0 0.0
        %1110 = vmatpush.msra.mxu0 0.0
        %1111 = vmatpush.msra.mxu0 0.0
        %1112 = vmatpush.msra.mxu0 0.0
        %1113 = vmatpush.msra.mxu0 0.0
        %1114 = vmatpush.msra.mxu0 0.0
        %1115 = vmatpush.msra.mxu0 0.0
        %1116 = vmatpush.msra.mxu0 0.0
        %1117 = vmatpush.msra.mxu0 0.0
        %1118 = vmatpush.msra.mxu0 %v942
        %1119 = vmatmul.f32.gmra.mxu0 %v961
        %v1120 = vpop.f32.mrf.mxu0
        %v1121 = vadd.f32 %v958, %v1120
        %1122 = vdwg.mxu0
        %v1123 = vmax.f32 %v981, 0.0
        %v1124 = vmax.f32 %v1001, 0.0
        %v1125 = vmax.f32 %v1021, 0.0
        %v1126 = vmax.f32 %v1041, 0.0
        %v1127 = vmax.f32 %v1061, 0.0
        %v1128 = vmax.f32 %v1081, 0.0
        %v1129 = vmax.f32 %v1101, 0.0
        %v1130 = vmax.f32 %v1121, 0.0
        %s1131 = scalar_lea.vmem %s1, 32
        %v1132 = vld [vmem:[%s1131] sm:$0xff]
        %s1133 = scalar_lea.vmem %s2, 32
        %v1134 = vld [vmem:[%s1133] sm:$0xff]
        %1136 = vset.pattern.permute.xlu0 0
        %1137 = vperm.xlu0 %1136, %v1134
        %v1138 = vpop.permute.xlu0 %1137
        %v1141 = vsel %vm223, %v1132, 0
        %1143 = vmatpush.msra.mxu0 0.0
        %1144 = vmatpush.msra.mxu0 0.0
        %1145 = vmatpush.msra.mxu0 0.0
        %1146 = vmatpush.msra.mxu0 0.0
        %1147 = vmatpush.msra.mxu0 0.0
        %1148 = vmatpush.msra.mxu0 0.0
        %1149 = vmatpush.msra.mxu0 0.0
        %1150 = vmatpush.msra.mxu0 0.0
        %1151 = vmatpush.msra.mxu0 0.0
        %1152 = vmatpush.msra.mxu0 0.0
        %1153 = vmatpush.msra.mxu0 0.0
        %1154 = vmatpush.msra.mxu0 0.0
        %1155 = vmatpush.msra.mxu0 0.0
        %1156 = vmatpush.msra.mxu0 0.0
        %1157 = vmatpush.msra.mxu0 0.0
        %1158 = vmatpush.msra.mxu0 %v1123
        %1159 = vmatmul.f32.gmra.mxu0 %v1141
        %v1160 = vpop.f32.mrf.mxu0
        %v1161 = vadd.f32 %v1138, %v1160
        %1162 = vdwg.mxu0
        %1163 = vmatpush.msra.mxu0 0.0
        %1164 = vmatpush.msra.mxu0 0.0
        %1165 = vmatpush.msra.mxu0 0.0
        %1166 = vmatpush.msra.mxu0 0.0
        %1167 = vmatpush.msra.mxu0 0.0
        %1168 = vmatpush.msra.mxu0 0.0
        %1169 = vmatpush.msra.mxu0 0.0
        %1170 = vmatpush.msra.mxu0 0.0
        %1171 = vmatpush.msra.mxu0 0.0
        %1172 = vmatpush.msra.mxu0 0.0
        %1173 = vmatpush.msra.mxu0 0.0
        %1174 = vmatpush.msra.mxu0 0.0
        %1175 = vmatpush.msra.mxu0 0.0
        %1176 = vmatpush.msra.mxu0 0.0
        %1177 = vmatpush.msra.mxu0 0.0
        %1178 = vmatpush.msra.mxu0 %v1124
        %1179 = vmatmul.f32.gmra.mxu0 %v1141
        %v1180 = vpop.f32.mrf.mxu0
        %v1181 = vadd.f32 %v1138, %v1180
        %1182 = vdwg.mxu0
        %1183 = vmatpush.msra.mxu0 0.0
        %1184 = vmatpush.msra.mxu0 0.0
        %1185 = vmatpush.msra.mxu0 0.0
        %1186 = vmatpush.msra.mxu0 0.0
        %1187 = vmatpush.msra.mxu0 0.0
        %1188 = vmatpush.msra.mxu0 0.0
        %1189 = vmatpush.msra.mxu0 0.0
        %1190 = vmatpush.msra.mxu0 0.0
        %1191 = vmatpush.msra.mxu0 0.0
        %1192 = vmatpush.msra.mxu0 0.0
        %1193 = vmatpush.msra.mxu0 0.0
        %1194 = vmatpush.msra.mxu0 0.0
        %1195 = vmatpush.msra.mxu0 0.0
        %1196 = vmatpush.msra.mxu0 0.0
        %1197 = vmatpush.msra.mxu0 0.0
        %1198 = vmatpush.msra.mxu0 %v1125
        %1199 = vmatmul.f32.gmra.mxu0 %v1141
        %v1200 = vpop.f32.mrf.mxu0
        %v1201 = vadd.f32 %v1138, %v1200
        %1202 = vdwg.mxu0
        %1203 = vmatpush.msra.mxu0 0.0
        %1204 = vmatpush.msra.mxu0 0.0
        %1205 = vmatpush.msra.mxu0 0.0
        %1206 = vmatpush.msra.mxu0 0.0
        %1207 = vmatpush.msra.mxu0 0.0
        %1208 = vmatpush.msra.mxu0 0.0
        %1209 = vmatpush.msra.mxu0 0.0
        %1210 = vmatpush.msra.mxu0 0.0
        %1211 = vmatpush.msra.mxu0 0.0
        %1212 = vmatpush.msra.mxu0 0.0
        %1213 = vmatpush.msra.mxu0 0.0
        %1214 = vmatpush.msra.mxu0 0.0
        %1215 = vmatpush.msra.mxu0 0.0
        %1216 = vmatpush.msra.mxu0 0.0
        %1217 = vmatpush.msra.mxu0 0.0
        %1218 = vmatpush.msra.mxu0 %v1126
        %1219 = vmatmul.f32.gmra.mxu0 %v1141
        %v1220 = vpop.f32.mrf.mxu0
        %v1221 = vadd.f32 %v1138, %v1220
        %1222 = vdwg.mxu0
        %1223 = vmatpush.msra.mxu0 0.0
        %1224 = vmatpush.msra.mxu0 0.0
        %1225 = vmatpush.msra.mxu0 0.0
        %1226 = vmatpush.msra.mxu0 0.0
        %1227 = vmatpush.msra.mxu0 0.0
        %1228 = vmatpush.msra.mxu0 0.0
        %1229 = vmatpush.msra.mxu0 0.0
        %1230 = vmatpush.msra.mxu0 0.0
        %1231 = vmatpush.msra.mxu0 0.0
        %1232 = vmatpush.msra.mxu0 0.0
        %1233 = vmatpush.msra.mxu0 0.0
        %1234 = vmatpush.msra.mxu0 0.0
        %1235 = vmatpush.msra.mxu0 0.0
        %1236 = vmatpush.msra.mxu0 0.0
        %1237 = vmatpush.msra.mxu0 0.0
        %1238 = vmatpush.msra.mxu0 %v1127
        %1239 = vmatmul.f32.gmra.mxu0 %v1141
        %v1240 = vpop.f32.mrf.mxu0
        %v1241 = vadd.f32 %v1138, %v1240
        %1242 = vdwg.mxu0
        %1243 = vmatpush.msra.mxu0 0.0
        %1244 = vmatpush.msra.mxu0 0.0
        %1245 = vmatpush.msra.mxu0 0.0
        %1246 = vmatpush.msra.mxu0 0.0
        %1247 = vmatpush.msra.mxu0 0.0
        %1248 = vmatpush.msra.mxu0 0.0
        %1249 = vmatpush.msra.mxu0 0.0
        %1250 = vmatpush.msra.mxu0 0.0
        %1251 = vmatpush.msra.mxu0 0.0
        %1252 = vmatpush.msra.mxu0 0.0
        %1253 = vmatpush.msra.mxu0 0.0
        %1254 = vmatpush.msra.mxu0 0.0
        %1255 = vmatpush.msra.mxu0 0.0
        %1256 = vmatpush.msra.mxu0 0.0
        %1257 = vmatpush.msra.mxu0 0.0
        %1258 = vmatpush.msra.mxu0 %v1128
        %1259 = vmatmul.f32.gmra.mxu0 %v1141
        %v1260 = vpop.f32.mrf.mxu0
        %v1261 = vadd.f32 %v1138, %v1260
        %1262 = vdwg.mxu0
        %1263 = vmatpush.msra.mxu0 0.0
        %1264 = vmatpush.msra.mxu0 0.0
        %1265 = vmatpush.msra.mxu0 0.0
        %1266 = vmatpush.msra.mxu0 0.0
        %1267 = vmatpush.msra.mxu0 0.0
        %1268 = vmatpush.msra.mxu0 0.0
        %1269 = vmatpush.msra.mxu0 0.0
        %1270 = vmatpush.msra.mxu0 0.0
        %1271 = vmatpush.msra.mxu0 0.0
        %1272 = vmatpush.msra.mxu0 0.0
        %1273 = vmatpush.msra.mxu0 0.0
        %1274 = vmatpush.msra.mxu0 0.0
        %1275 = vmatpush.msra.mxu0 0.0
        %1276 = vmatpush.msra.mxu0 0.0
        %1277 = vmatpush.msra.mxu0 0.0
        %1278 = vmatpush.msra.mxu0 %v1129
        %1279 = vmatmul.f32.gmra.mxu0 %v1141
        %v1280 = vpop.f32.mrf.mxu0
        %v1281 = vadd.f32 %v1138, %v1280
        %1282 = vdwg.mxu0
        %1283 = vmatpush.msra.mxu0 0.0
        %1284 = vmatpush.msra.mxu0 0.0
        %1285 = vmatpush.msra.mxu0 0.0
        %1286 = vmatpush.msra.mxu0 0.0
        %1287 = vmatpush.msra.mxu0 0.0
        %1288 = vmatpush.msra.mxu0 0.0
        %1289 = vmatpush.msra.mxu0 0.0
        %1290 = vmatpush.msra.mxu0 0.0
        %1291 = vmatpush.msra.mxu0 0.0
        %1292 = vmatpush.msra.mxu0 0.0
        %1293 = vmatpush.msra.mxu0 0.0
        %1294 = vmatpush.msra.mxu0 0.0
        %1295 = vmatpush.msra.mxu0 0.0
        %1296 = vmatpush.msra.mxu0 0.0
        %1297 = vmatpush.msra.mxu0 0.0
        %1298 = vmatpush.msra.mxu0 %v1130
        %1299 = vmatmul.f32.gmra.mxu0 %v1141
        %v1300 = vpop.f32.mrf.mxu0
        %v1301 = vadd.f32 %v1138, %v1300
        %1302 = vdwg.mxu0
        %v1303 = vmax.f32 %v1161, 0.0
        %v1304 = vmax.f32 %v1181, 0.0
        %v1305 = vmax.f32 %v1201, 0.0
        %v1306 = vmax.f32 %v1221, 0.0
        %v1307 = vmax.f32 %v1241, 0.0
        %v1308 = vmax.f32 %v1261, 0.0
        %v1309 = vmax.f32 %v1281, 0.0
        %v1310 = vmax.f32 %v1301, 0.0
        %s1311 = scalar_lea.vmem %s1, 40
        %v1312 = vld [vmem:[%s1311] sm:$0xff]
        %s1313 = scalar_lea.vmem %s2, 40
        %v1314 = vld [vmem:[%s1313] sm:$0xff]
        %1316 = vset.pattern.permute.xlu0 0
        %1317 = vperm.xlu0 %1316, %v1314
        %v1318 = vpop.permute.xlu0 %1317
        %v1321 = vsel %vm223, %v1312, 0
        %1323 = vmatpush.msra.mxu0 0.0
        %1324 = vmatpush.msra.mxu0 0.0
        %1325 = vmatpush.msra.mxu0 0.0
        %1326 = vmatpush.msra.mxu0 0.0
        %1327 = vmatpush.msra.mxu0 0.0
        %1328 = vmatpush.msra.mxu0 0.0
        %1329 = vmatpush.msra.mxu0 0.0
        %1330 = vmatpush.msra.mxu0 0.0
        %1331 = vmatpush.msra.mxu0 0.0
        %1332 = vmatpush.msra.mxu0 0.0
        %1333 = vmatpush.msra.mxu0 0.0
        %1334 = vmatpush.msra.mxu0 0.0
        %1335 = vmatpush.msra.mxu0 0.0
        %1336 = vmatpush.msra.mxu0 0.0
        %1337 = vmatpush.msra.mxu0 0.0
        %1338 = vmatpush.msra.mxu0 %v1303
        %1339 = vmatmul.f32.gmra.mxu0 %v1321
        %v1340 = vpop.f32.mrf.mxu0
        %v1341 = vadd.f32 %v1318, %v1340
        %1342 = vdwg.mxu0
        %1343 = vmatpush.msra.mxu0 0.0
        %1344 = vmatpush.msra.mxu0 0.0
        %1345 = vmatpush.msra.mxu0 0.0
        %1346 = vmatpush.msra.mxu0 0.0
        %1347 = vmatpush.msra.mxu0 0.0
        %1348 = vmatpush.msra.mxu0 0.0
        %1349 = vmatpush.msra.mxu0 0.0
        %1350 = vmatpush.msra.mxu0 0.0
        %1351 = vmatpush.msra.mxu0 0.0
        %1352 = vmatpush.msra.mxu0 0.0
        %1353 = vmatpush.msra.mxu0 0.0
        %1354 = vmatpush.msra.mxu0 0.0
        %1355 = vmatpush.msra.mxu0 0.0
        %1356 = vmatpush.msra.mxu0 0.0
        %1357 = vmatpush.msra.mxu0 0.0
        %1358 = vmatpush.msra.mxu0 %v1304
        %1359 = vmatmul.f32.gmra.mxu0 %v1321
        %v1360 = vpop.f32.mrf.mxu0
        %v1361 = vadd.f32 %v1318, %v1360
        %1362 = vdwg.mxu0
        %1363 = vmatpush.msra.mxu0 0.0
        %1364 = vmatpush.msra.mxu0 0.0
        %1365 = vmatpush.msra.mxu0 0.0
        %1366 = vmatpush.msra.mxu0 0.0
        %1367 = vmatpush.msra.mxu0 0.0
        %1368 = vmatpush.msra.mxu0 0.0
        %1369 = vmatpush.msra.mxu0 0.0
        %1370 = vmatpush.msra.mxu0 0.0
        %1371 = vmatpush.msra.mxu0 0.0
        %1372 = vmatpush.msra.mxu0 0.0
        %1373 = vmatpush.msra.mxu0 0.0
        %1374 = vmatpush.msra.mxu0 0.0
        %1375 = vmatpush.msra.mxu0 0.0
        %1376 = vmatpush.msra.mxu0 0.0
        %1377 = vmatpush.msra.mxu0 0.0
        %1378 = vmatpush.msra.mxu0 %v1305
        %1379 = vmatmul.f32.gmra.mxu0 %v1321
        %v1380 = vpop.f32.mrf.mxu0
        %v1381 = vadd.f32 %v1318, %v1380
        %1382 = vdwg.mxu0
        %1383 = vmatpush.msra.mxu0 0.0
        %1384 = vmatpush.msra.mxu0 0.0
        %1385 = vmatpush.msra.mxu0 0.0
        %1386 = vmatpush.msra.mxu0 0.0
        %1387 = vmatpush.msra.mxu0 0.0
        %1388 = vmatpush.msra.mxu0 0.0
        %1389 = vmatpush.msra.mxu0 0.0
        %1390 = vmatpush.msra.mxu0 0.0
        %1391 = vmatpush.msra.mxu0 0.0
        %1392 = vmatpush.msra.mxu0 0.0
        %1393 = vmatpush.msra.mxu0 0.0
        %1394 = vmatpush.msra.mxu0 0.0
        %1395 = vmatpush.msra.mxu0 0.0
        %1396 = vmatpush.msra.mxu0 0.0
        %1397 = vmatpush.msra.mxu0 0.0
        %1398 = vmatpush.msra.mxu0 %v1306
        %1399 = vmatmul.f32.gmra.mxu0 %v1321
        %v1400 = vpop.f32.mrf.mxu0
        %v1401 = vadd.f32 %v1318, %v1400
        %1402 = vdwg.mxu0
        %1403 = vmatpush.msra.mxu0 0.0
        %1404 = vmatpush.msra.mxu0 0.0
        %1405 = vmatpush.msra.mxu0 0.0
        %1406 = vmatpush.msra.mxu0 0.0
        %1407 = vmatpush.msra.mxu0 0.0
        %1408 = vmatpush.msra.mxu0 0.0
        %1409 = vmatpush.msra.mxu0 0.0
        %1410 = vmatpush.msra.mxu0 0.0
        %1411 = vmatpush.msra.mxu0 0.0
        %1412 = vmatpush.msra.mxu0 0.0
        %1413 = vmatpush.msra.mxu0 0.0
        %1414 = vmatpush.msra.mxu0 0.0
        %1415 = vmatpush.msra.mxu0 0.0
        %1416 = vmatpush.msra.mxu0 0.0
        %1417 = vmatpush.msra.mxu0 0.0
        %1418 = vmatpush.msra.mxu0 %v1307
        %1419 = vmatmul.f32.gmra.mxu0 %v1321
        %v1420 = vpop.f32.mrf.mxu0
        %v1421 = vadd.f32 %v1318, %v1420
        %1422 = vdwg.mxu0
        %1423 = vmatpush.msra.mxu0 0.0
        %1424 = vmatpush.msra.mxu0 0.0
        %1425 = vmatpush.msra.mxu0 0.0
        %1426 = vmatpush.msra.mxu0 0.0
        %1427 = vmatpush.msra.mxu0 0.0
        %1428 = vmatpush.msra.mxu0 0.0
        %1429 = vmatpush.msra.mxu0 0.0
        %1430 = vmatpush.msra.mxu0 0.0
        %1431 = vmatpush.msra.mxu0 0.0
        %1432 = vmatpush.msra.mxu0 0.0
        %1433 = vmatpush.msra.mxu0 0.0
        %1434 = vmatpush.msra.mxu0 0.0
        %1435 = vmatpush.msra.mxu0 0.0
        %1436 = vmatpush.msra.mxu0 0.0
        %1437 = vmatpush.msra.mxu0 0.0
        %1438 = vmatpush.msra.mxu0 %v1308
        %1439 = vmatmul.f32.gmra.mxu0 %v1321
        %v1440 = vpop.f32.mrf.mxu0
        %v1441 = vadd.f32 %v1318, %v1440
        %1442 = vdwg.mxu0
        %1443 = vmatpush.msra.mxu0 0.0
        %1444 = vmatpush.msra.mxu0 0.0
        %1445 = vmatpush.msra.mxu0 0.0
        %1446 = vmatpush.msra.mxu0 0.0
        %1447 = vmatpush.msra.mxu0 0.0
        %1448 = vmatpush.msra.mxu0 0.0
        %1449 = vmatpush.msra.mxu0 0.0
        %1450 = vmatpush.msra.mxu0 0.0
        %1451 = vmatpush.msra.mxu0 0.0
        %1452 = vmatpush.msra.mxu0 0.0
        %1453 = vmatpush.msra.mxu0 0.0
        %1454 = vmatpush.msra.mxu0 0.0
        %1455 = vmatpush.msra.mxu0 0.0
        %1456 = vmatpush.msra.mxu0 0.0
        %1457 = vmatpush.msra.mxu0 0.0
        %1458 = vmatpush.msra.mxu0 %v1309
        %1459 = vmatmul.f32.gmra.mxu0 %v1321
        %v1460 = vpop.f32.mrf.mxu0
        %v1461 = vadd.f32 %v1318, %v1460
        %1462 = vdwg.mxu0
        %1463 = vmatpush.msra.mxu0 0.0
        %1464 = vmatpush.msra.mxu0 0.0
        %1465 = vmatpush.msra.mxu0 0.0
        %1466 = vmatpush.msra.mxu0 0.0
        %1467 = vmatpush.msra.mxu0 0.0
        %1468 = vmatpush.msra.mxu0 0.0
        %1469 = vmatpush.msra.mxu0 0.0
        %1470 = vmatpush.msra.mxu0 0.0
        %1471 = vmatpush.msra.mxu0 0.0
        %1472 = vmatpush.msra.mxu0 0.0
        %1473 = vmatpush.msra.mxu0 0.0
        %1474 = vmatpush.msra.mxu0 0.0
        %1475 = vmatpush.msra.mxu0 0.0
        %1476 = vmatpush.msra.mxu0 0.0
        %1477 = vmatpush.msra.mxu0 0.0
        %1478 = vmatpush.msra.mxu0 %v1310
        %1479 = vmatmul.f32.gmra.mxu0 %v1321
        %v1480 = vpop.f32.mrf.mxu0
        %v1481 = vadd.f32 %v1318, %v1480
        %1482 = vdwg.mxu0
        %v1483 = vmax.f32 %v1341, 0.0
        %v1484 = vmax.f32 %v1361, 0.0
        %v1485 = vmax.f32 %v1381, 0.0
        %v1486 = vmax.f32 %v1401, 0.0
        %v1487 = vmax.f32 %v1421, 0.0
        %v1488 = vmax.f32 %v1441, 0.0
        %v1489 = vmax.f32 %v1461, 0.0
        %v1490 = vmax.f32 %v1481, 0.0
        %s1491 = scalar_lea.vmem %s1, 80
        %v1492 = vld [vmem:[%s1491] sm:$0xff]
        %v1493 = vadd.f32 %v1483, %v943
        %v1494 = vadd.f32 %v1484, %v944
        %v1495 = vadd.f32 %v1485, %v945
        %v1496 = vadd.f32 %v1486, %v946
        %v1497 = vadd.f32 %v1487, %v947
        %v1498 = vadd.f32 %v1488, %v948
        %v1499 = vadd.f32 %v1489, %v949
        %v1500 = vadd.f32 %v1490, %v950
        %s1501 = scalar_lea.vmem %s2, 80
        %v1502 = vld [vmem:[%s1501] sm:$0xff]
        %1504 = vset.pattern.permute.xlu0 0
        %1505 = vperm.xlu0 %1504, %v1502
        %v1506 = vpop.permute.xlu0 %1505
        %v1509 = vsel %vm223, %v1492, 0
        %1511 = vmatpush.msra.mxu0 0.0
        %1512 = vmatpush.msra.mxu0 0.0
        %1513 = vmatpush.msra.mxu0 0.0
        %1514 = vmatpush.msra.mxu0 0.0
        %1515 = vmatpush.msra.mxu0 0.0
        %1516 = vmatpush.msra.mxu0 0.0
        %1517 = vmatpush.msra.mxu0 0.0
        %1518 = vmatpush.msra.mxu0 0.0
        %1519 = vmatpush.msra.mxu0 0.0
        %1520 = vmatpush.msra.mxu0 0.0
        %1521 = vmatpush.msra.mxu0 0.0
        %1522 = vmatpush.msra.mxu0 0.0
        %1523 = vmatpush.msra.mxu0 0.0
        %1524 = vmatpush.msra.mxu0 0.0
        %1525 = vmatpush.msra.mxu0 0.0
        %1526 = vmatpush.msra.mxu0 %v1493
        %1527 = vmatmul.f32.gmra.mxu0 %v1509
        %v1528 = vpop.f32.mrf.mxu0
        %v1529 = vadd.f32 %v1506, %v1528
        %1530 = vdwg.mxu0
        %1531 = vmatpush.msra.mxu0 0.0
        %1532 = vmatpush.msra.mxu0 0.0
        %1533 = vmatpush.msra.mxu0 0.0
        %1534 = vmatpush.msra.mxu0 0.0
        %1535 = vmatpush.msra.mxu0 0.0
        %1536 = vmatpush.msra.mxu0 0.0
        %1537 = vmatpush.msra.mxu0 0.0
        %1538 = vmatpush.msra.mxu0 0.0
        %1539 = vmatpush.msra.mxu0 0.0
        %1540 = vmatpush.msra.mxu0 0.0
        %1541 = vmatpush.msra.mxu0 0.0
        %1542 = vmatpush.msra.mxu0 0.0
        %1543 = vmatpush.msra.mxu0 0.0
        %1544 = vmatpush.msra.mxu0 0.0
        %1545 = vmatpush.msra.mxu0 0.0
        %1546 = vmatpush.msra.mxu0 %v1494
        %1547 = vmatmul.f32.gmra.mxu0 %v1509
        %v1548 = vpop.f32.mrf.mxu0
        %v1549 = vadd.f32 %v1506, %v1548
        %1550 = vdwg.mxu0
        %1551 = vmatpush.msra.mxu0 0.0
        %1552 = vmatpush.msra.mxu0 0.0
        %1553 = vmatpush.msra.mxu0 0.0
        %1554 = vmatpush.msra.mxu0 0.0
        %1555 = vmatpush.msra.mxu0 0.0
        %1556 = vmatpush.msra.mxu0 0.0
        %1557 = vmatpush.msra.mxu0 0.0
        %1558 = vmatpush.msra.mxu0 0.0
        %1559 = vmatpush.msra.mxu0 0.0
        %1560 = vmatpush.msra.mxu0 0.0
        %1561 = vmatpush.msra.mxu0 0.0
        %1562 = vmatpush.msra.mxu0 0.0
        %1563 = vmatpush.msra.mxu0 0.0
        %1564 = vmatpush.msra.mxu0 0.0
        %1565 = vmatpush.msra.mxu0 0.0
        %1566 = vmatpush.msra.mxu0 %v1495
        %1567 = vmatmul.f32.gmra.mxu0 %v1509
        %v1568 = vpop.f32.mrf.mxu0
        %v1569 = vadd.f32 %v1506, %v1568
        %1570 = vdwg.mxu0
        %1571 = vmatpush.msra.mxu0 0.0
        %1572 = vmatpush.msra.mxu0 0.0
        %1573 = vmatpush.msra.mxu0 0.0
        %1574 = vmatpush.msra.mxu0 0.0
        %1575 = vmatpush.msra.mxu0 0.0
        %1576 = vmatpush.msra.mxu0 0.0
        %1577 = vmatpush.msra.mxu0 0.0
        %1578 = vmatpush.msra.mxu0 0.0
        %1579 = vmatpush.msra.mxu0 0.0
        %1580 = vmatpush.msra.mxu0 0.0
        %1581 = vmatpush.msra.mxu0 0.0
        %1582 = vmatpush.msra.mxu0 0.0
        %1583 = vmatpush.msra.mxu0 0.0
        %1584 = vmatpush.msra.mxu0 0.0
        %1585 = vmatpush.msra.mxu0 0.0
        %1586 = vmatpush.msra.mxu0 %v1496
        %1587 = vmatmul.f32.gmra.mxu0 %v1509
        %v1588 = vpop.f32.mrf.mxu0
        %v1589 = vadd.f32 %v1506, %v1588
        %1590 = vdwg.mxu0
        %1591 = vmatpush.msra.mxu0 0.0
        %1592 = vmatpush.msra.mxu0 0.0
        %1593 = vmatpush.msra.mxu0 0.0
        %1594 = vmatpush.msra.mxu0 0.0
        %1595 = vmatpush.msra.mxu0 0.0
        %1596 = vmatpush.msra.mxu0 0.0
        %1597 = vmatpush.msra.mxu0 0.0
        %1598 = vmatpush.msra.mxu0 0.0
        %1599 = vmatpush.msra.mxu0 0.0
        %1600 = vmatpush.msra.mxu0 0.0
        %1601 = vmatpush.msra.mxu0 0.0
        %1602 = vmatpush.msra.mxu0 0.0
        %1603 = vmatpush.msra.mxu0 0.0
        %1604 = vmatpush.msra.mxu0 0.0
        %1605 = vmatpush.msra.mxu0 0.0
        %1606 = vmatpush.msra.mxu0 %v1497
        %1607 = vmatmul.f32.gmra.mxu0 %v1509
        %v1608 = vpop.f32.mrf.mxu0
        %v1609 = vadd.f32 %v1506, %v1608
        %1610 = vdwg.mxu0
        %1611 = vmatpush.msra.mxu0 0.0
        %1612 = vmatpush.msra.mxu0 0.0
        %1613 = vmatpush.msra.mxu0 0.0
        %1614 = vmatpush.msra.mxu0 0.0
        %1615 = vmatpush.msra.mxu0 0.0
        %1616 = vmatpush.msra.mxu0 0.0
        %1617 = vmatpush.msra.mxu0 0.0
        %1618 = vmatpush.msra.mxu0 0.0
        %1619 = vmatpush.msra.mxu0 0.0
        %1620 = vmatpush.msra.mxu0 0.0
        %1621 = vmatpush.msra.mxu0 0.0
        %1622 = vmatpush.msra.mxu0 0.0
        %1623 = vmatpush.msra.mxu0 0.0
        %1624 = vmatpush.msra.mxu0 0.0
        %1625 = vmatpush.msra.mxu0 0.0
        %1626 = vmatpush.msra.mxu0 %v1498
        %1627 = vmatmul.f32.gmra.mxu0 %v1509
        %v1628 = vpop.f32.mrf.mxu0
        %v1629 = vadd.f32 %v1506, %v1628
        %1630 = vdwg.mxu0
        %1631 = vmatpush.msra.mxu0 0.0
        %1632 = vmatpush.msra.mxu0 0.0
        %1633 = vmatpush.msra.mxu0 0.0
        %1634 = vmatpush.msra.mxu0 0.0
        %1635 = vmatpush.msra.mxu0 0.0
        %1636 = vmatpush.msra.mxu0 0.0
        %1637 = vmatpush.msra.mxu0 0.0
        %1638 = vmatpush.msra.mxu0 0.0
        %1639 = vmatpush.msra.mxu0 0.0
        %1640 = vmatpush.msra.mxu0 0.0
        %1641 = vmatpush.msra.mxu0 0.0
        %1642 = vmatpush.msra.mxu0 0.0
        %1643 = vmatpush.msra.mxu0 0.0
        %1644 = vmatpush.msra.mxu0 0.0
        %1645 = vmatpush.msra.mxu0 0.0
        %1646 = vmatpush.msra.mxu0 %v1499
        %1647 = vmatmul.f32.gmra.mxu0 %v1509
        %v1648 = vpop.f32.mrf.mxu0
        %v1649 = vadd.f32 %v1506, %v1648
        %1650 = vdwg.mxu0
        %1651 = vmatpush.msra.mxu0 0.0
        %1652 = vmatpush.msra.mxu0 0.0
        %1653 = vmatpush.msra.mxu0 0.0
        %1654 = vmatpush.msra.mxu0 0.0
        %1655 = vmatpush.msra.mxu0 0.0
        %1656 = vmatpush.msra.mxu0 0.0
        %1657 = vmatpush.msra.mxu0 0.0
        %1658 = vmatpush.msra.mxu0 0.0
        %1659 = vmatpush.msra.mxu0 0.0
        %1660 = vmatpush.msra.mxu0 0.0
        %1661 = vmatpush.msra.mxu0 0.0
        %1662 = vmatpush.msra.mxu0 0.0
        %1663 = vmatpush.msra.mxu0 0.0
        %1664 = vmatpush.msra.mxu0 0.0
        %1665 = vmatpush.msra.mxu0 0.0
        %1666 = vmatpush.msra.mxu0 %v1500
        %1667 = vmatmul.f32.gmra.mxu0 %v1509
        %v1668 = vpop.f32.mrf.mxu0
        %v1669 = vadd.f32 %v1506, %v1668
        %1670 = vdwg.mxu0
        %v1671 = vmax.f32 %v1529, 0.0
        %v1672 = vmax.f32 %v1549, 0.0
        %v1673 = vmax.f32 %v1569, 0.0
        %v1674 = vmax.f32 %v1589, 0.0
        %v1675 = vmax.f32 %v1609, 0.0
        %v1676 = vmax.f32 %v1629, 0.0
        %v1677 = vmax.f32 %v1649, 0.0
        %v1678 = vmax.f32 %v1669, 0.0
        %v1679 = vadd.f32 %v1671, %v1671
        %v1680 = vadd.f32 %v1672, %v1672
        %v1681 = vadd.f32 %v1673, %v1673
        %v1682 = vadd.f32 %v1674, %v1674
        %v1683 = vadd.f32 %v1675, %v1675
        %v1684 = vadd.f32 %v1676, %v1676
        %v1685 = vadd.f32 %v1677, %v1677
        %v1686 = vadd.f32 %v1678, %v1678
        %s1687 = scalar_lea.vmem %s1, 48
        %v1688 = vld [vmem:[%s1687] sm:$0xff]
        %s1689 = scalar_lea.vmem %s2, 48
        %v1690 = vld [vmem:[%s1689] sm:$0xff]
        %1692 = vset.pattern.permute.xlu0 0
        %1693 = vperm.xlu0 %1692, %v1690
        %v1694 = vpop.permute.xlu0 %1693
        %v1697 = vsel %vm223, %v1688, 0
        %1699 = vmatpush.msra.mxu0 0.0
        %1700 = vmatpush.msra.mxu0 0.0
        %1701 = vmatpush.msra.mxu0 0.0
        %1702 = vmatpush.msra.mxu0 0.0
        %1703 = vmatpush.msra.mxu0 0.0
        %1704 = vmatpush.msra.mxu0 0.0
        %1705 = vmatpush.msra.mxu0 0.0
        %1706 = vmatpush.msra.mxu0 0.0
        %1707 = vmatpush.msra.mxu0 0.0
        %1708 = vmatpush.msra.mxu0 0.0
        %1709 = vmatpush.msra.mxu0 0.0
        %1710 = vmatpush.msra.mxu0 0.0
        %1711 = vmatpush.msra.mxu0 0.0
        %1712 = vmatpush.msra.mxu0 0.0
        %1713 = vmatpush.msra.mxu0 0.0
        %1714 = vmatpush.msra.mxu0 %v1671
        %1715 = vmatmul.f32.gmra.mxu0 %v1697
        %v1716 = vpop.f32.mrf.mxu0
        %v1717 = vadd.f32 %v1694, %v1716
        %1718 = vdwg.mxu0
        %1719 = vmatpush.msra.mxu0 0.0
        %1720 = vmatpush.msra.mxu0 0.0
        %1721 = vmatpush.msra.mxu0 0.0
        %1722 = vmatpush.msra.mxu0 0.0
        %1723 = vmatpush.msra.mxu0 0.0
        %1724 = vmatpush.msra.mxu0 0.0
        %1725 = vmatpush.msra.mxu0 0.0
        %1726 = vmatpush.msra.mxu0 0.0
        %1727 = vmatpush.msra.mxu0 0.0
        %1728 = vmatpush.msra.mxu0 0.0
        %1729 = vmatpush.msra.mxu0 0.0
        %1730 = vmatpush.msra.mxu0 0.0
        %1731 = vmatpush.msra.mxu0 0.0
        %1732 = vmatpush.msra.mxu0 0.0
        %1733 = vmatpush.msra.mxu0 0.0
        %1734 = vmatpush.msra.mxu0 %v1672
        %1735 = vmatmul.f32.gmra.mxu0 %v1697
        %v1736 = vpop.f32.mrf.mxu0
        %v1737 = vadd.f32 %v1694, %v1736
        %1738 = vdwg.mxu0
        %1739 = vmatpush.msra.mxu0 0.0
        %1740 = vmatpush.msra.mxu0 0.0
        %1741 = vmatpush.msra.mxu0 0.0
        %1742 = vmatpush.msra.mxu0 0.0
        %1743 = vmatpush.msra.mxu0 0.0
        %1744 = vmatpush.msra.mxu0 0.0
        %1745 = vmatpush.msra.mxu0 0.0
        %1746 = vmatpush.msra.mxu0 0.0
        %1747 = vmatpush.msra.mxu0 0.0
        %1748 = vmatpush.msra.mxu0 0.0
        %1749 = vmatpush.msra.mxu0 0.0
        %1750 = vmatpush.msra.mxu0 0.0
        %1751 = vmatpush.msra.mxu0 0.0
        %1752 = vmatpush.msra.mxu0 0.0
        %1753 = vmatpush.msra.mxu0 0.0
        %1754 = vmatpush.msra.mxu0 %v1673
        %1755 = vmatmul.f32.gmra.mxu0 %v1697
        %v1756 = vpop.f32.mrf.mxu0
        %v1757 = vadd.f32 %v1694, %v1756
        %1758 = vdwg.mxu0
        %1759 = vmatpush.msra.mxu0 0.0
        %1760 = vmatpush.msra.mxu0 0.0
        %1761 = vmatpush.msra.mxu0 0.0
        %1762 = vmatpush.msra.mxu0 0.0
        %1763 = vmatpush.msra.mxu0 0.0
        %1764 = vmatpush.msra.mxu0 0.0
        %1765 = vmatpush.msra.mxu0 0.0
        %1766 = vmatpush.msra.mxu0 0.0
        %1767 = vmatpush.msra.mxu0 0.0
        %1768 = vmatpush.msra.mxu0 0.0
        %1769 = vmatpush.msra.mxu0 0.0
        %1770 = vmatpush.msra.mxu0 0.0
        %1771 = vmatpush.msra.mxu0 0.0
        %1772 = vmatpush.msra.mxu0 0.0
        %1773 = vmatpush.msra.mxu0 0.0
        %1774 = vmatpush.msra.mxu0 %v1674
        %1775 = vmatmul.f32.gmra.mxu0 %v1697
        %v1776 = vpop.f32.mrf.mxu0
        %v1777 = vadd.f32 %v1694, %v1776
        %1778 = vdwg.mxu0
        %1779 = vmatpush.msra.mxu0 0.0
        %1780 = vmatpush.msra.mxu0 0.0
        %1781 = vmatpush.msra.mxu0 0.0
        %1782 = vmatpush.msra.mxu0 0.0
        %1783 = vmatpush.msra.mxu0 0.0
        %1784 = vmatpush.msra.mxu0 0.0
        %1785 = vmatpush.msra.mxu0 0.0
        %1786 = vmatpush.msra.mxu0 0.0
        %1787 = vmatpush.msra.mxu0 0.0
        %1788 = vmatpush.msra.mxu0 0.0
        %1789 = vmatpush.msra.mxu0 0.0
        %1790 = vmatpush.msra.mxu0 0.0
        %1791 = vmatpush.msra.mxu0 0.0
        %1792 = vmatpush.msra.mxu0 0.0
        %1793 = vmatpush.msra.mxu0 0.0
        %1794 = vmatpush.msra.mxu0 %v1675
        %1795 = vmatmul.f32.gmra.mxu0 %v1697
        %v1796 = vpop.f32.mrf.mxu0
        %v1797 = vadd.f32 %v1694, %v1796
        %1798 = vdwg.mxu0
        %1799 = vmatpush.msra.mxu0 0.0
        %1800 = vmatpush.msra.mxu0 0.0
        %1801 = vmatpush.msra.mxu0 0.0
        %1802 = vmatpush.msra.mxu0 0.0
        %1803 = vmatpush.msra.mxu0 0.0
        %1804 = vmatpush.msra.mxu0 0.0
        %1805 = vmatpush.msra.mxu0 0.0
        %1806 = vmatpush.msra.mxu0 0.0
        %1807 = vmatpush.msra.mxu0 0.0
        %1808 = vmatpush.msra.mxu0 0.0
        %1809 = vmatpush.msra.mxu0 0.0
        %1810 = vmatpush.msra.mxu0 0.0
        %1811 = vmatpush.msra.mxu0 0.0
        %1812 = vmatpush.msra.mxu0 0.0
        %1813 = vmatpush.msra.mxu0 0.0
        %1814 = vmatpush.msra.mxu0 %v1676
        %1815 = vmatmul.f32.gmra.mxu0 %v1697
        %v1816 = vpop.f32.mrf.mxu0
        %v1817 = vadd.f32 %v1694, %v1816
        %1818 = vdwg.mxu0
        %1819 = vmatpush.msra.mxu0 0.0
        %1820 = vmatpush.msra.mxu0 0.0
        %1821 = vmatpush.msra.mxu0 0.0
        %1822 = vmatpush.msra.mxu0 0.0
        %1823 = vmatpush.msra.mxu0 0.0
        %1824 = vmatpush.msra.mxu0 0.0
        %1825 = vmatpush.msra.mxu0 0.0
        %1826 = vmatpush.msra.mxu0 0.0
        %1827 = vmatpush.msra.mxu0 0.0
        %1828 = vmatpush.msra.mxu0 0.0
        %1829 = vmatpush.msra.mxu0 0.0
        %1830 = vmatpush.msra.mxu0 0.0
        %1831 = vmatpush.msra.mxu0 0.0
        %1832 = vmatpush.msra.mxu0 0.0
        %1833 = vmatpush.msra.mxu0 0.0
        %1834 = vmatpush.msra.mxu0 %v1677
        %1835 = vmatmul.f32.gmra.mxu0 %v1697
        %v1836 = vpop.f32.mrf.mxu0
        %v1837 = vadd.f32 %v1694, %v1836
        %1838 = vdwg.mxu0
        %1839 = vmatpush.msra.mxu0 0.0
        %1840 = vmatpush.msra.mxu0 0.0
        %1841 = vmatpush.msra.mxu0 0.0
        %1842 = vmatpush.msra.mxu0 0.0
        %1843 = vmatpush.msra.mxu0 0.0
        %1844 = vmatpush.msra.mxu0 0.0
        %1845 = vmatpush.msra.mxu0 0.0
        %1846 = vmatpush.msra.mxu0 0.0
        %1847 = vmatpush.msra.mxu0 0.0
        %1848 = vmatpush.msra.mxu0 0.0
        %1849 = vmatpush.msra.mxu0 0.0
        %1850 = vmatpush.msra.mxu0 0.0
        %1851 = vmatpush.msra.mxu0 0.0
        %1852 = vmatpush.msra.mxu0 0.0
        %1853 = vmatpush.msra.mxu0 0.0
        %1854 = vmatpush.msra.mxu0 %v1678
        %1855 = vmatmul.f32.gmra.mxu0 %v1697
        %v1856 = vpop.f32.mrf.mxu0
        %v1857 = vadd.f32 %v1694, %v1856
        %1858 = vdwg.mxu0
        %v1859 = vmax.f32 %v1717, 0.0
        %v1860 = vmax.f32 %v1737, 0.0
        %v1861 = vmax.f32 %v1757, 0.0
        %v1862 = vmax.f32 %v1777, 0.0
        %v1863 = vmax.f32 %v1797, 0.0
        %v1864 = vmax.f32 %v1817, 0.0
        %v1865 = vmax.f32 %v1837, 0.0
        %v1866 = vmax.f32 %v1857, 0.0
        %s1867 = scalar_lea.vmem %s1, 56
        %v1868 = vld [vmem:[%s1867] sm:$0xff]
        %s1869 = scalar_lea.vmem %s2, 56
        %v1870 = vld [vmem:[%s1869] sm:$0xff]
        %1872 = vset.pattern.permute.xlu0 0
        %1873 = vperm.xlu0 %1872, %v1870
        %v1874 = vpop.permute.xlu0 %1873
        %v1877 = vsel %vm223, %v1868, 0
        %1879 = vmatpush.msra.mxu0 0.0
        %1880 = vmatpush.msra.mxu0 0.0
        %1881 = vmatpush.msra.mxu0 0.0
        %1882 = vmatpush.msra.mxu0 0.0
        %1883 = vmatpush.msra.mxu0 0.0
        %1884 = vmatpush.msra.mxu0 0.0
        %1885 = vmatpush.msra.mxu0 0.0
        %1886 = vmatpush.msra.mxu0 0.0
        %1887 = vmatpush.msra.mxu0 0.0
        %1888 = vmatpush.msra.mxu0 0.0
        %1889 = vmatpush.msra.mxu0 0.0
        %1890 = vmatpush.msra.mxu0 0.0
        %1891 = vmatpush.msra.mxu0 0.0
        %1892 = vmatpush.msra.mxu0 0.0
        %1893 = vmatpush.msra.mxu0 0.0
        %1894 = vmatpush.msra.mxu0 %v1859
        %1895 = vmatmul.f32.gmra.mxu0 %v1877
        %v1896 = vpop.f32.mrf.mxu0
        %v1897 = vadd.f32 %v1874, %v1896
        %1898 = vdwg.mxu0
        %1899 = vmatpush.msra.mxu0 0.0
        %1900 = vmatpush.msra.mxu0 0.0
        %1901 = vmatpush.msra.mxu0 0.0
        %1902 = vmatpush.msra.mxu0 0.0
        %1903 = vmatpush.msra.mxu0 0.0
        %1904 = vmatpush.msra.mxu0 0.0
        %1905 = vmatpush.msra.mxu0 0.0
        %1906 = vmatpush.msra.mxu0 0.0
        %1907 = vmatpush.msra.mxu0 0.0
        %1908 = vmatpush.msra.mxu0 0.0
        %1909 = vmatpush.msra.mxu0 0.0
        %1910 = vmatpush.msra.mxu0 0.0
        %1911 = vmatpush.msra.mxu0 0.0
        %1912 = vmatpush.msra.mxu0 0.0
        %1913 = vmatpush.msra.mxu0 0.0
        %1914 = vmatpush.msra.mxu0 %v1860
        %1915 = vmatmul.f32.gmra.mxu0 %v1877
        %v1916 = vpop.f32.mrf.mxu0
        %v1917 = vadd.f32 %v1874, %v1916
        %1918 = vdwg.mxu0
        %1919 = vmatpush.msra.mxu0 0.0
        %1920 = vmatpush.msra.mxu0 0.0
        %1921 = vmatpush.msra.mxu0 0.0
        %1922 = vmatpush.msra.mxu0 0.0
        %1923 = vmatpush.msra.mxu0 0.0
        %1924 = vmatpush.msra.mxu0 0.0
        %1925 = vmatpush.msra.mxu0 0.0
        %1926 = vmatpush.msra.mxu0 0.0
        %1927 = vmatpush.msra.mxu0 0.0
        %1928 = vmatpush.msra.mxu0 0.0
        %1929 = vmatpush.msra.mxu0 0.0
        %1930 = vmatpush.msra.mxu0 0.0
        %1931 = vmatpush.msra.mxu0 0.0
        %1932 = vmatpush.msra.mxu0 0.0
        %1933 = vmatpush.msra.mxu0 0.0
        %1934 = vmatpush.msra.mxu0 %v1861
        %1935 = vmatmul.f32.gmra.mxu0 %v1877
        %v1936 = vpop.f32.mrf.mxu0
        %v1937 = vadd.f32 %v1874, %v1936
        %1938 = vdwg.mxu0
        %1939 = vmatpush.msra.mxu0 0.0
        %1940 = vmatpush.msra.mxu0 0.0
        %1941 = vmatpush.msra.mxu0 0.0
        %1942 = vmatpush.msra.mxu0 0.0
        %1943 = vmatpush.msra.mxu0 0.0
        %1944 = vmatpush.msra.mxu0 0.0
        %1945 = vmatpush.msra.mxu0 0.0
        %1946 = vmatpush.msra.mxu0 0.0
        %1947 = vmatpush.msra.mxu0 0.0
        %1948 = vmatpush.msra.mxu0 0.0
        %1949 = vmatpush.msra.mxu0 0.0
        %1950 = vmatpush.msra.mxu0 0.0
        %1951 = vmatpush.msra.mxu0 0.0
        %1952 = vmatpush.msra.mxu0 0.0
        %1953 = vmatpush.msra.mxu0 0.0
        %1954 = vmatpush.msra.mxu0 %v1862
        %1955 = vmatmul.f32.gmra.mxu0 %v1877
        %v1956 = vpop.f32.mrf.mxu0
        %v1957 = vadd.f32 %v1874, %v1956
        %1958 = vdwg.mxu0
        %1959 = vmatpush.msra.mxu0 0.0
        %1960 = vmatpush.msra.mxu0 0.0
        %1961 = vmatpush.msra.mxu0 0.0
        %1962 = vmatpush.msra.mxu0 0.0
        %1963 = vmatpush.msra.mxu0 0.0
        %1964 = vmatpush.msra.mxu0 0.0
        %1965 = vmatpush.msra.mxu0 0.0
        %1966 = vmatpush.msra.mxu0 0.0
        %1967 = vmatpush.msra.mxu0 0.0
        %1968 = vmatpush.msra.mxu0 0.0
        %1969 = vmatpush.msra.mxu0 0.0
        %1970 = vmatpush.msra.mxu0 0.0
        %1971 = vmatpush.msra.mxu0 0.0
        %1972 = vmatpush.msra.mxu0 0.0
        %1973 = vmatpush.msra.mxu0 0.0
        %1974 = vmatpush.msra.mxu0 %v1863
        %1975 = vmatmul.f32.gmra.mxu0 %v1877
        %v1976 = vpop.f32.mrf.mxu0
        %v1977 = vadd.f32 %v1874, %v1976
        %1978 = vdwg.mxu0
        %1979 = vmatpush.msra.mxu0 0.0
        %1980 = vmatpush.msra.mxu0 0.0
        %1981 = vmatpush.msra.mxu0 0.0
        %1982 = vmatpush.msra.mxu0 0.0
        %1983 = vmatpush.msra.mxu0 0.0
        %1984 = vmatpush.msra.mxu0 0.0
        %1985 = vmatpush.msra.mxu0 0.0
        %1986 = vmatpush.msra.mxu0 0.0
        %1987 = vmatpush.msra.mxu0 0.0
        %1988 = vmatpush.msra.mxu0 0.0
        %1989 = vmatpush.msra.mxu0 0.0
        %1990 = vmatpush.msra.mxu0 0.0
        %1991 = vmatpush.msra.mxu0 0.0
        %1992 = vmatpush.msra.mxu0 0.0
        %1993 = vmatpush.msra.mxu0 0.0
        %1994 = vmatpush.msra.mxu0 %v1864
        %1995 = vmatmul.f32.gmra.mxu0 %v1877
        %v1996 = vpop.f32.mrf.mxu0
        %v1997 = vadd.f32 %v1874, %v1996
        %1998 = vdwg.mxu0
        %1999 = vmatpush.msra.mxu0 0.0
        %2000 = vmatpush.msra.mxu0 0.0
        %2001 = vmatpush.msra.mxu0 0.0
        %2002 = vmatpush.msra.mxu0 0.0
        %2003 = vmatpush.msra.mxu0 0.0
        %2004 = vmatpush.msra.mxu0 0.0
        %2005 = vmatpush.msra.mxu0 0.0
        %2006 = vmatpush.msra.mxu0 0.0
        %2007 = vmatpush.msra.mxu0 0.0
        %2008 = vmatpush.msra.mxu0 0.0
        %2009 = vmatpush.msra.mxu0 0.0
        %2010 = vmatpush.msra.mxu0 0.0
        %2011 = vmatpush.msra.mxu0 0.0
        %2012 = vmatpush.msra.mxu0 0.0
        %2013 = vmatpush.msra.mxu0 0.0
        %2014 = vmatpush.msra.mxu0 %v1865
        %2015 = vmatmul.f32.gmra.mxu0 %v1877
        %v2016 = vpop.f32.mrf.mxu0
        %v2017 = vadd.f32 %v1874, %v2016
        %2018 = vdwg.mxu0
        %2019 = vmatpush.msra.mxu0 0.0
        %2020 = vmatpush.msra.mxu0 0.0
        %2021 = vmatpush.msra.mxu0 0.0
        %2022 = vmatpush.msra.mxu0 0.0
        %2023 = vmatpush.msra.mxu0 0.0
        %2024 = vmatpush.msra.mxu0 0.0
        %2025 = vmatpush.msra.mxu0 0.0
        %2026 = vmatpush.msra.mxu0 0.0
        %2027 = vmatpush.msra.mxu0 0.0
        %2028 = vmatpush.msra.mxu0 0.0
        %2029 = vmatpush.msra.mxu0 0.0
        %2030 = vmatpush.msra.mxu0 0.0
        %2031 = vmatpush.msra.mxu0 0.0
        %2032 = vmatpush.msra.mxu0 0.0
        %2033 = vmatpush.msra.mxu0 0.0
        %2034 = vmatpush.msra.mxu0 %v1866
        %2035 = vmatmul.f32.gmra.mxu0 %v1877
        %v2036 = vpop.f32.mrf.mxu0
        %v2037 = vadd.f32 %v1874, %v2036
        %2038 = vdwg.mxu0
        %v2039 = vmax.f32 %v1897, 0.0
        %v2040 = vmax.f32 %v1917, 0.0
        %v2041 = vmax.f32 %v1937, 0.0
        %v2042 = vmax.f32 %v1957, 0.0
        %v2043 = vmax.f32 %v1977, 0.0
        %v2044 = vmax.f32 %v1997, 0.0
        %v2045 = vmax.f32 %v2017, 0.0
        %v2046 = vmax.f32 %v2037, 0.0
        %s2047 = scalar_lea.vmem %s1, 64
        %v2048 = vld [vmem:[%s2047] sm:$0xff]
        %s2049 = scalar_lea.vmem %s2, 64
        %v2050 = vld [vmem:[%s2049] sm:$0xff]
        %2052 = vset.pattern.permute.xlu0 0
        %2053 = vperm.xlu0 %2052, %v2050
        %v2054 = vpop.permute.xlu0 %2053
        %v2057 = vsel %vm223, %v2048, 0
        %2059 = vmatpush.msra.mxu0 0.0
        %2060 = vmatpush.msra.mxu0 0.0
        %2061 = vmatpush.msra.mxu0 0.0
        %2062 = vmatpush.msra.mxu0 0.0
        %2063 = vmatpush.msra.mxu0 0.0
        %2064 = vmatpush.msra.mxu0 0.0
        %2065 = vmatpush.msra.mxu0 0.0
        %2066 = vmatpush.msra.mxu0 0.0
        %2067 = vmatpush.msra.mxu0 0.0
        %2068 = vmatpush.msra.mxu0 0.0
        %2069 = vmatpush.msra.mxu0 0.0
        %2070 = vmatpush.msra.mxu0 0.0
        %2071 = vmatpush.msra.mxu0 0.0
        %2072 = vmatpush.msra.mxu0 0.0
        %2073 = vmatpush.msra.mxu0 0.0
        %2074 = vmatpush.msra.mxu0 %v2039
        %2075 = vmatmul.f32.gmra.mxu0 %v2057
        %v2076 = vpop.f32.mrf.mxu0
        %v2077 = vadd.f32 %v2054, %v2076
        %2078 = vdwg.mxu0
        %2079 = vmatpush.msra.mxu0 0.0
        %2080 = vmatpush.msra.mxu0 0.0
        %2081 = vmatpush.msra.mxu0 0.0
        %2082 = vmatpush.msra.mxu0 0.0
        %2083 = vmatpush.msra.mxu0 0.0
        %2084 = vmatpush.msra.mxu0 0.0
        %2085 = vmatpush.msra.mxu0 0.0
        %2086 = vmatpush.msra.mxu0 0.0
        %2087 = vmatpush.msra.mxu0 0.0
        %2088 = vmatpush.msra.mxu0 0.0
        %2089 = vmatpush.msra.mxu0 0.0
        %2090 = vmatpush.msra.mxu0 0.0
        %2091 = vmatpush.msra.mxu0 0.0
        %2092 = vmatpush.msra.mxu0 0.0
        %2093 = vmatpush.msra.mxu0 0.0
        %2094 = vmatpush.msra.mxu0 %v2040
        %2095 = vmatmul.f32.gmra.mxu0 %v2057
        %v2096 = vpop.f32.mrf.mxu0
        %v2097 = vadd.f32 %v2054, %v2096
        %2098 = vdwg.mxu0
        %2099 = vmatpush.msra.mxu0 0.0
        %2100 = vmatpush.msra.mxu0 0.0
        %2101 = vmatpush.msra.mxu0 0.0
        %2102 = vmatpush.msra.mxu0 0.0
        %2103 = vmatpush.msra.mxu0 0.0
        %2104 = vmatpush.msra.mxu0 0.0
        %2105 = vmatpush.msra.mxu0 0.0
        %2106 = vmatpush.msra.mxu0 0.0
        %2107 = vmatpush.msra.mxu0 0.0
        %2108 = vmatpush.msra.mxu0 0.0
        %2109 = vmatpush.msra.mxu0 0.0
        %2110 = vmatpush.msra.mxu0 0.0
        %2111 = vmatpush.msra.mxu0 0.0
        %2112 = vmatpush.msra.mxu0 0.0
        %2113 = vmatpush.msra.mxu0 0.0
        %2114 = vmatpush.msra.mxu0 %v2041
        %2115 = vmatmul.f32.gmra.mxu0 %v2057
        %v2116 = vpop.f32.mrf.mxu0
        %v2117 = vadd.f32 %v2054, %v2116
        %2118 = vdwg.mxu0
        %2119 = vmatpush.msra.mxu0 0.0
        %2120 = vmatpush.msra.mxu0 0.0
        %2121 = vmatpush.msra.mxu0 0.0
        %2122 = vmatpush.msra.mxu0 0.0
        %2123 = vmatpush.msra.mxu0 0.0
        %2124 = vmatpush.msra.mxu0 0.0
        %2125 = vmatpush.msra.mxu0 0.0
        %2126 = vmatpush.msra.mxu0 0.0
        %2127 = vmatpush.msra.mxu0 0.0
        %2128 = vmatpush.msra.mxu0 0.0
        %2129 = vmatpush.msra.mxu0 0.0
        %2130 = vmatpush.msra.mxu0 0.0
        %2131 = vmatpush.msra.mxu0 0.0
        %2132 = vmatpush.msra.mxu0 0.0
        %2133 = vmatpush.msra.mxu0 0.0
        %2134 = vmatpush.msra.mxu0 %v2042
        %2135 = vmatmul.f32.gmra.mxu0 %v2057
        %v2136 = vpop.f32.mrf.mxu0
        %v2137 = vadd.f32 %v2054, %v2136
        %2138 = vdwg.mxu0
        %2139 = vmatpush.msra.mxu0 0.0
        %2140 = vmatpush.msra.mxu0 0.0
        %2141 = vmatpush.msra.mxu0 0.0
        %2142 = vmatpush.msra.mxu0 0.0
        %2143 = vmatpush.msra.mxu0 0.0
        %2144 = vmatpush.msra.mxu0 0.0
        %2145 = vmatpush.msra.mxu0 0.0
        %2146 = vmatpush.msra.mxu0 0.0
        %2147 = vmatpush.msra.mxu0 0.0
        %2148 = vmatpush.msra.mxu0 0.0
        %2149 = vmatpush.msra.mxu0 0.0
        %2150 = vmatpush.msra.mxu0 0.0
        %2151 = vmatpush.msra.mxu0 0.0
        %2152 = vmatpush.msra.mxu0 0.0
        %2153 = vmatpush.msra.mxu0 0.0
        %2154 = vmatpush.msra.mxu0 %v2043
        %2155 = vmatmul.f32.gmra.mxu0 %v2057
        %v2156 = vpop.f32.mrf.mxu0
        %v2157 = vadd.f32 %v2054, %v2156
        %2158 = vdwg.mxu0
        %2159 = vmatpush.msra.mxu0 0.0
        %2160 = vmatpush.msra.mxu0 0.0
        %2161 = vmatpush.msra.mxu0 0.0
        %2162 = vmatpush.msra.mxu0 0.0
        %2163 = vmatpush.msra.mxu0 0.0
        %2164 = vmatpush.msra.mxu0 0.0
        %2165 = vmatpush.msra.mxu0 0.0
        %2166 = vmatpush.msra.mxu0 0.0
        %2167 = vmatpush.msra.mxu0 0.0
        %2168 = vmatpush.msra.mxu0 0.0
        %2169 = vmatpush.msra.mxu0 0.0
        %2170 = vmatpush.msra.mxu0 0.0
        %2171 = vmatpush.msra.mxu0 0.0
        %2172 = vmatpush.msra.mxu0 0.0
        %2173 = vmatpush.msra.mxu0 0.0
        %2174 = vmatpush.msra.mxu0 %v2044
        %2175 = vmatmul.f32.gmra.mxu0 %v2057
        %v2176 = vpop.f32.mrf.mxu0
        %v2177 = vadd.f32 %v2054, %v2176
        %2178 = vdwg.mxu0
        %2179 = vmatpush.msra.mxu0 0.0
        %2180 = vmatpush.msra.mxu0 0.0
        %2181 = vmatpush.msra.mxu0 0.0
        %2182 = vmatpush.msra.mxu0 0.0
        %2183 = vmatpush.msra.mxu0 0.0
        %2184 = vmatpush.msra.mxu0 0.0
        %2185 = vmatpush.msra.mxu0 0.0
        %2186 = vmatpush.msra.mxu0 0.0
        %2187 = vmatpush.msra.mxu0 0.0
        %2188 = vmatpush.msra.mxu0 0.0
        %2189 = vmatpush.msra.mxu0 0.0
        %2190 = vmatpush.msra.mxu0 0.0
        %2191 = vmatpush.msra.mxu0 0.0
        %2192 = vmatpush.msra.mxu0 0.0
        %2193 = vmatpush.msra.mxu0 0.0
        %2194 = vmatpush.msra.mxu0 %v2045
        %2195 = vmatmul.f32.gmra.mxu0 %v2057
        %v2196 = vpop.f32.mrf.mxu0
        %v2197 = vadd.f32 %v2054, %v2196
        %2198 = vdwg.mxu0
        %2199 = vmatpush.msra.mxu0 0.0
        %2200 = vmatpush.msra.mxu0 0.0
        %2201 = vmatpush.msra.mxu0 0.0
        %2202 = vmatpush.msra.mxu0 0.0
        %2203 = vmatpush.msra.mxu0 0.0
        %2204 = vmatpush.msra.mxu0 0.0
        %2205 = vmatpush.msra.mxu0 0.0
        %2206 = vmatpush.msra.mxu0 0.0
        %2207 = vmatpush.msra.mxu0 0.0
        %2208 = vmatpush.msra.mxu0 0.0
        %2209 = vmatpush.msra.mxu0 0.0
        %2210 = vmatpush.msra.mxu0 0.0
        %2211 = vmatpush.msra.mxu0 0.0
        %2212 = vmatpush.msra.mxu0 0.0
        %2213 = vmatpush.msra.mxu0 0.0
        %2214 = vmatpush.msra.mxu0 %v2046
        %2215 = vmatmul.f32.gmra.mxu0 %v2057
        %v2216 = vpop.f32.mrf.mxu0
        %v2217 = vadd.f32 %v2054, %v2216
        %2218 = vdwg.mxu0
        %v2219 = vmax.f32 %v2077, 0.0
        %v2220 = vmax.f32 %v2097, 0.0
        %v2221 = vmax.f32 %v2117, 0.0
        %v2222 = vmax.f32 %v2137, 0.0
        %v2223 = vmax.f32 %v2157, 0.0
        %v2224 = vmax.f32 %v2177, 0.0
        %v2225 = vmax.f32 %v2197, 0.0
        %v2226 = vmax.f32 %v2217, 0.0
        %s2227 = scalar_lea.vmem %s1, 88
        %v2228 = vld [vmem:[%s2227] sm:$0xff]
        %v2229 = vadd.f32 %v2219, %v1679
        %v2230 = vadd.f32 %v2220, %v1680
        %v2231 = vadd.f32 %v2221, %v1681
        %v2232 = vadd.f32 %v2222, %v1682
        %v2233 = vadd.f32 %v2223, %v1683
        %v2234 = vadd.f32 %v2224, %v1684
        %v2235 = vadd.f32 %v2225, %v1685
        %v2236 = vadd.f32 %v2226, %v1686
        %s2237 = scalar_lea.vmem %s2, 88
        %v2238 = vld [vmem:[%s2237] sm:$0xff]
        %2240 = vset.pattern.permute.xlu0 0
        %2241 = vperm.xlu0 %2240, %v2238
        %v2242 = vpop.permute.xlu0 %2241
        %v2245 = vsel %vm223, %v2228, 0
        %2247 = vmatpush.msra.mxu0 0.0
        %2248 = vmatpush.msra.mxu0 0.0
        %2249 = vmatpush.msra.mxu0 0.0
        %2250 = vmatpush.msra.mxu0 0.0
        %2251 = vmatpush.msra.mxu0 0.0
        %2252 = vmatpush.msra.mxu0 0.0
        %2253 = vmatpush.msra.mxu0 0.0
        %2254 = vmatpush.msra.mxu0 0.0
        %2255 = vmatpush.msra.mxu0 0.0
        %2256 = vmatpush.msra.mxu0 0.0
        %2257 = vmatpush.msra.mxu0 0.0
        %2258 = vmatpush.msra.mxu0 0.0
        %2259 = vmatpush.msra.mxu0 0.0
        %2260 = vmatpush.msra.mxu0 0.0
        %2261 = vmatpush.msra.mxu0 0.0
        %2262 = vmatpush.msra.mxu0 %v2229
        %2263 = vmatmul.f32.gmra.mxu0 %v2245
        %v2264 = vpop.f32.mrf.mxu0
        %v2265 = vadd.f32 %v2242, %v2264
        %2266 = vdwg.mxu0
        %2267 = vmatpush.msra.mxu0 0.0
        %2268 = vmatpush.msra.mxu0 0.0
        %2269 = vmatpush.msra.mxu0 0.0
        %2270 = vmatpush.msra.mxu0 0.0
        %2271 = vmatpush.msra.mxu0 0.0
        %2272 = vmatpush.msra.mxu0 0.0
        %2273 = vmatpush.msra.mxu0 0.0
        %2274 = vmatpush.msra.mxu0 0.0
        %2275 = vmatpush.msra.mxu0 0.0
        %2276 = vmatpush.msra.mxu0 0.0
        %2277 = vmatpush.msra.mxu0 0.0
        %2278 = vmatpush.msra.mxu0 0.0
        %2279 = vmatpush.msra.mxu0 0.0
        %2280 = vmatpush.msra.mxu0 0.0
        %2281 = vmatpush.msra.mxu0 0.0
        %2282 = vmatpush.msra.mxu0 %v2230
        %2283 = vmatmul.f32.gmra.mxu0 %v2245
        %v2284 = vpop.f32.mrf.mxu0
        %v2285 = vadd.f32 %v2242, %v2284
        %2286 = vdwg.mxu0
        %2287 = vmatpush.msra.mxu0 0.0
        %2288 = vmatpush.msra.mxu0 0.0
        %2289 = vmatpush.msra.mxu0 0.0
        %2290 = vmatpush.msra.mxu0 0.0
        %2291 = vmatpush.msra.mxu0 0.0
        %2292 = vmatpush.msra.mxu0 0.0
        %2293 = vmatpush.msra.mxu0 0.0
        %2294 = vmatpush.msra.mxu0 0.0
        %2295 = vmatpush.msra.mxu0 0.0
        %2296 = vmatpush.msra.mxu0 0.0
        %2297 = vmatpush.msra.mxu0 0.0
        %2298 = vmatpush.msra.mxu0 0.0
        %2299 = vmatpush.msra.mxu0 0.0
        %2300 = vmatpush.msra.mxu0 0.0
        %2301 = vmatpush.msra.mxu0 0.0
        %2302 = vmatpush.msra.mxu0 %v2231
        %2303 = vmatmul.f32.gmra.mxu0 %v2245
        %v2304 = vpop.f32.mrf.mxu0
        %v2305 = vadd.f32 %v2242, %v2304
        %2306 = vdwg.mxu0
        %2307 = vmatpush.msra.mxu0 0.0
        %2308 = vmatpush.msra.mxu0 0.0
        %2309 = vmatpush.msra.mxu0 0.0
        %2310 = vmatpush.msra.mxu0 0.0
        %2311 = vmatpush.msra.mxu0 0.0
        %2312 = vmatpush.msra.mxu0 0.0
        %2313 = vmatpush.msra.mxu0 0.0
        %2314 = vmatpush.msra.mxu0 0.0
        %2315 = vmatpush.msra.mxu0 0.0
        %2316 = vmatpush.msra.mxu0 0.0
        %2317 = vmatpush.msra.mxu0 0.0
        %2318 = vmatpush.msra.mxu0 0.0
        %2319 = vmatpush.msra.mxu0 0.0
        %2320 = vmatpush.msra.mxu0 0.0
        %2321 = vmatpush.msra.mxu0 0.0
        %2322 = vmatpush.msra.mxu0 %v2232
        %2323 = vmatmul.f32.gmra.mxu0 %v2245
        %v2324 = vpop.f32.mrf.mxu0
        %v2325 = vadd.f32 %v2242, %v2324
        %2326 = vdwg.mxu0
        %2327 = vmatpush.msra.mxu0 0.0
        %2328 = vmatpush.msra.mxu0 0.0
        %2329 = vmatpush.msra.mxu0 0.0
        %2330 = vmatpush.msra.mxu0 0.0
        %2331 = vmatpush.msra.mxu0 0.0
        %2332 = vmatpush.msra.mxu0 0.0
        %2333 = vmatpush.msra.mxu0 0.0
        %2334 = vmatpush.msra.mxu0 0.0
        %2335 = vmatpush.msra.mxu0 0.0
        %2336 = vmatpush.msra.mxu0 0.0
        %2337 = vmatpush.msra.mxu0 0.0
        %2338 = vmatpush.msra.mxu0 0.0
        %2339 = vmatpush.msra.mxu0 0.0
        %2340 = vmatpush.msra.mxu0 0.0
        %2341 = vmatpush.msra.mxu0 0.0
        %2342 = vmatpush.msra.mxu0 %v2233
        %2343 = vmatmul.f32.gmra.mxu0 %v2245
        %v2344 = vpop.f32.mrf.mxu0
        %v2345 = vadd.f32 %v2242, %v2344
        %2346 = vdwg.mxu0
        %2347 = vmatpush.msra.mxu0 0.0
        %2348 = vmatpush.msra.mxu0 0.0
        %2349 = vmatpush.msra.mxu0 0.0
        %2350 = vmatpush.msra.mxu0 0.0
        %2351 = vmatpush.msra.mxu0 0.0
        %2352 = vmatpush.msra.mxu0 0.0
        %2353 = vmatpush.msra.mxu0 0.0
        %2354 = vmatpush.msra.mxu0 0.0
        %2355 = vmatpush.msra.mxu0 0.0
        %2356 = vmatpush.msra.mxu0 0.0
        %2357 = vmatpush.msra.mxu0 0.0
        %2358 = vmatpush.msra.mxu0 0.0
        %2359 = vmatpush.msra.mxu0 0.0
        %2360 = vmatpush.msra.mxu0 0.0
        %2361 = vmatpush.msra.mxu0 0.0
        %2362 = vmatpush.msra.mxu0 %v2234
        %2363 = vmatmul.f32.gmra.mxu0 %v2245
        %v2364 = vpop.f32.mrf.mxu0
        %v2365 = vadd.f32 %v2242, %v2364
        %2366 = vdwg.mxu0
        %2367 = vmatpush.msra.mxu0 0.0
        %2368 = vmatpush.msra.mxu0 0.0
        %2369 = vmatpush.msra.mxu0 0.0
        %2370 = vmatpush.msra.mxu0 0.0
        %2371 = vmatpush.msra.mxu0 0.0
        %2372 = vmatpush.msra.mxu0 0.0
        %2373 = vmatpush.msra.mxu0 0.0
        %2374 = vmatpush.msra.mxu0 0.0
        %2375 = vmatpush.msra.mxu0 0.0
        %2376 = vmatpush.msra.mxu0 0.0
        %2377 = vmatpush.msra.mxu0 0.0
        %2378 = vmatpush.msra.mxu0 0.0
        %2379 = vmatpush.msra.mxu0 0.0
        %2380 = vmatpush.msra.mxu0 0.0
        %2381 = vmatpush.msra.mxu0 0.0
        %2382 = vmatpush.msra.mxu0 %v2235
        %2383 = vmatmul.f32.gmra.mxu0 %v2245
        %v2384 = vpop.f32.mrf.mxu0
        %v2385 = vadd.f32 %v2242, %v2384
        %2386 = vdwg.mxu0
        %2387 = vmatpush.msra.mxu0 0.0
        %2388 = vmatpush.msra.mxu0 0.0
        %2389 = vmatpush.msra.mxu0 0.0
        %2390 = vmatpush.msra.mxu0 0.0
        %2391 = vmatpush.msra.mxu0 0.0
        %2392 = vmatpush.msra.mxu0 0.0
        %2393 = vmatpush.msra.mxu0 0.0
        %2394 = vmatpush.msra.mxu0 0.0
        %2395 = vmatpush.msra.mxu0 0.0
        %2396 = vmatpush.msra.mxu0 0.0
        %2397 = vmatpush.msra.mxu0 0.0
        %2398 = vmatpush.msra.mxu0 0.0
        %2399 = vmatpush.msra.mxu0 0.0
        %2400 = vmatpush.msra.mxu0 0.0
        %2401 = vmatpush.msra.mxu0 0.0
        %2402 = vmatpush.msra.mxu0 %v2236
        %2403 = vmatmul.f32.gmra.mxu0 %v2245
        %v2404 = vpop.f32.mrf.mxu0
        %v2405 = vadd.f32 %v2242, %v2404
        %2406 = vdwg.mxu0
        %v2407 = vmax.f32 %v2265, 0.0
        %v2408 = vmax.f32 %v2285, 0.0
        %v2409 = vmax.f32 %v2305, 0.0
        %v2410 = vmax.f32 %v2325, 0.0
        %v2411 = vmax.f32 %v2345, 0.0
        %v2412 = vmax.f32 %v2365, 0.0
        %v2413 = vmax.f32 %v2385, 0.0
        %v2414 = vmax.f32 %v2405, 0.0
        %s2415 = scalar_lea.vmem %s1, 96
        %v2416 = vld [vmem:[%s2415] sm:$0xff]
        %v2417 = vadd.f32 %v2407, %v208
        %v2418 = vadd.f32 %v2408, %v209
        %v2419 = vadd.f32 %v2409, %v210
        %v2420 = vadd.f32 %v2410, %v211
        %v2421 = vadd.f32 %v2411, %v212
        %v2422 = vadd.f32 %v2412, %v213
        %v2423 = vadd.f32 %v2413, %v214
        %v2424 = vadd.f32 %v2414, %v215
        %s2425 = scalar_lea.vmem %s2, 96
        %v2426 = vld [vmem:[%s2425] sm:$0xff]
        %2428 = vset.pattern.permute.xlu0 0
        %2429 = vperm.xlu0 %2428, %v2426
        %v2430 = vpop.permute.xlu0 %2429
        %v2433 = vsel %vm223, %v2416, 0
        %2435 = vmatpush.msra.mxu0 0.0
        %2436 = vmatpush.msra.mxu0 0.0
        %2437 = vmatpush.msra.mxu0 0.0
        %2438 = vmatpush.msra.mxu0 0.0
        %2439 = vmatpush.msra.mxu0 0.0
        %2440 = vmatpush.msra.mxu0 0.0
        %2441 = vmatpush.msra.mxu0 0.0
        %2442 = vmatpush.msra.mxu0 0.0
        %2443 = vmatpush.msra.mxu0 0.0
        %2444 = vmatpush.msra.mxu0 0.0
        %2445 = vmatpush.msra.mxu0 0.0
        %2446 = vmatpush.msra.mxu0 0.0
        %2447 = vmatpush.msra.mxu0 0.0
        %2448 = vmatpush.msra.mxu0 0.0
        %2449 = vmatpush.msra.mxu0 0.0
        %2450 = vmatpush.msra.mxu0 %v2417
        %2451 = vmatmul.f32.gmra.mxu0 %v2433
        %v2452 = vpop.f32.mrf.mxu0
        %v2453 = vadd.f32 %v2430, %v2452
        %2454 = vdwg.mxu0
        %2455 = vmatpush.msra.mxu0 0.0
        %2456 = vmatpush.msra.mxu0 0.0
        %2457 = vmatpush.msra.mxu0 0.0
        %2458 = vmatpush.msra.mxu0 0.0
        %2459 = vmatpush.msra.mxu0 0.0
        %2460 = vmatpush.msra.mxu0 0.0
        %2461 = vmatpush.msra.mxu0 0.0
        %2462 = vmatpush.msra.mxu0 0.0
        %2463 = vmatpush.msra.mxu0 0.0
        %2464 = vmatpush.msra.mxu0 0.0
        %2465 = vmatpush.msra.mxu0 0.0
        %2466 = vmatpush.msra.mxu0 0.0
        %2467 = vmatpush.msra.mxu0 0.0
        %2468 = vmatpush.msra.mxu0 0.0
        %2469 = vmatpush.msra.mxu0 0.0
        %2470 = vmatpush.msra.mxu0 %v2418
        %2471 = vmatmul.f32.gmra.mxu0 %v2433
        %v2472 = vpop.f32.mrf.mxu0
        %v2473 = vadd.f32 %v2430, %v2472
        %2474 = vdwg.mxu0
        %2475 = vmatpush.msra.mxu0 0.0
        %2476 = vmatpush.msra.mxu0 0.0
        %2477 = vmatpush.msra.mxu0 0.0
        %2478 = vmatpush.msra.mxu0 0.0
        %2479 = vmatpush.msra.mxu0 0.0
        %2480 = vmatpush.msra.mxu0 0.0
        %2481 = vmatpush.msra.mxu0 0.0
        %2482 = vmatpush.msra.mxu0 0.0
        %2483 = vmatpush.msra.mxu0 0.0
        %2484 = vmatpush.msra.mxu0 0.0
        %2485 = vmatpush.msra.mxu0 0.0
        %2486 = vmatpush.msra.mxu0 0.0
        %2487 = vmatpush.msra.mxu0 0.0
        %2488 = vmatpush.msra.mxu0 0.0
        %2489 = vmatpush.msra.mxu0 0.0
        %2490 = vmatpush.msra.mxu0 %v2419
        %2491 = vmatmul.f32.gmra.mxu0 %v2433
        %v2492 = vpop.f32.mrf.mxu0
        %v2493 = vadd.f32 %v2430, %v2492
        %2494 = vdwg.mxu0
        %2495 = vmatpush.msra.mxu0 0.0
        %2496 = vmatpush.msra.mxu0 0.0
        %2497 = vmatpush.msra.mxu0 0.0
        %2498 = vmatpush.msra.mxu0 0.0
        %2499 = vmatpush.msra.mxu0 0.0
        %2500 = vmatpush.msra.mxu0 0.0
        %2501 = vmatpush.msra.mxu0 0.0
        %2502 = vmatpush.msra.mxu0 0.0
        %2503 = vmatpush.msra.mxu0 0.0
        %2504 = vmatpush.msra.mxu0 0.0
        %2505 = vmatpush.msra.mxu0 0.0
        %2506 = vmatpush.msra.mxu0 0.0
        %2507 = vmatpush.msra.mxu0 0.0
        %2508 = vmatpush.msra.mxu0 0.0
        %2509 = vmatpush.msra.mxu0 0.0
        %2510 = vmatpush.msra.mxu0 %v2420
        %2511 = vmatmul.f32.gmra.mxu0 %v2433
        %v2512 = vpop.f32.mrf.mxu0
        %v2513 = vadd.f32 %v2430, %v2512
        %2514 = vdwg.mxu0
        %2515 = vmatpush.msra.mxu0 0.0
        %2516 = vmatpush.msra.mxu0 0.0
        %2517 = vmatpush.msra.mxu0 0.0
        %2518 = vmatpush.msra.mxu0 0.0
        %2519 = vmatpush.msra.mxu0 0.0
        %2520 = vmatpush.msra.mxu0 0.0
        %2521 = vmatpush.msra.mxu0 0.0
        %2522 = vmatpush.msra.mxu0 0.0
        %2523 = vmatpush.msra.mxu0 0.0
        %2524 = vmatpush.msra.mxu0 0.0
        %2525 = vmatpush.msra.mxu0 0.0
        %2526 = vmatpush.msra.mxu0 0.0
        %2527 = vmatpush.msra.mxu0 0.0
        %2528 = vmatpush.msra.mxu0 0.0
        %2529 = vmatpush.msra.mxu0 0.0
        %2530 = vmatpush.msra.mxu0 %v2421
        %2531 = vmatmul.f32.gmra.mxu0 %v2433
        %v2532 = vpop.f32.mrf.mxu0
        %v2533 = vadd.f32 %v2430, %v2532
        %2534 = vdwg.mxu0
        %2535 = vmatpush.msra.mxu0 0.0
        %2536 = vmatpush.msra.mxu0 0.0
        %2537 = vmatpush.msra.mxu0 0.0
        %2538 = vmatpush.msra.mxu0 0.0
        %2539 = vmatpush.msra.mxu0 0.0
        %2540 = vmatpush.msra.mxu0 0.0
        %2541 = vmatpush.msra.mxu0 0.0
        %2542 = vmatpush.msra.mxu0 0.0
        %2543 = vmatpush.msra.mxu0 0.0
        %2544 = vmatpush.msra.mxu0 0.0
        %2545 = vmatpush.msra.mxu0 0.0
        %2546 = vmatpush.msra.mxu0 0.0
        %2547 = vmatpush.msra.mxu0 0.0
        %2548 = vmatpush.msra.mxu0 0.0
        %2549 = vmatpush.msra.mxu0 0.0
        %2550 = vmatpush.msra.mxu0 %v2422
        %2551 = vmatmul.f32.gmra.mxu0 %v2433
        %v2552 = vpop.f32.mrf.mxu0
        %v2553 = vadd.f32 %v2430, %v2552
        %2554 = vdwg.mxu0
        %2555 = vmatpush.msra.mxu0 0.0
        %2556 = vmatpush.msra.mxu0 0.0
        %2557 = vmatpush.msra.mxu0 0.0
        %2558 = vmatpush.msra.mxu0 0.0
        %2559 = vmatpush.msra.mxu0 0.0
        %2560 = vmatpush.msra.mxu0 0.0
        %2561 = vmatpush.msra.mxu0 0.0
        %2562 = vmatpush.msra.mxu0 0.0
        %2563 = vmatpush.msra.mxu0 0.0
        %2564 = vmatpush.msra.mxu0 0.0
        %2565 = vmatpush.msra.mxu0 0.0
        %2566 = vmatpush.msra.mxu0 0.0
        %2567 = vmatpush.msra.mxu0 0.0
        %2568 = vmatpush.msra.mxu0 0.0
        %2569 = vmatpush.msra.mxu0 0.0
        %2570 = vmatpush.msra.mxu0 %v2423
        %2571 = vmatmul.f32.gmra.mxu0 %v2433
        %v2572 = vpop.f32.mrf.mxu0
        %v2573 = vadd.f32 %v2430, %v2572
        %2574 = vdwg.mxu0
        %2575 = vmatpush.msra.mxu0 0.0
        %2576 = vmatpush.msra.mxu0 0.0
        %2577 = vmatpush.msra.mxu0 0.0
        %2578 = vmatpush.msra.mxu0 0.0
        %2579 = vmatpush.msra.mxu0 0.0
        %2580 = vmatpush.msra.mxu0 0.0
        %2581 = vmatpush.msra.mxu0 0.0
        %2582 = vmatpush.msra.mxu0 0.0
        %2583 = vmatpush.msra.mxu0 0.0
        %2584 = vmatpush.msra.mxu0 0.0
        %2585 = vmatpush.msra.mxu0 0.0
        %2586 = vmatpush.msra.mxu0 0.0
        %2587 = vmatpush.msra.mxu0 0.0
        %2588 = vmatpush.msra.mxu0 0.0
        %2589 = vmatpush.msra.mxu0 0.0
        %2590 = vmatpush.msra.mxu0 %v2424
        %2591 = vmatmul.f32.gmra.mxu0 %v2433
        %v2592 = vpop.f32.mrf.mxu0
        %v2593 = vadd.f32 %v2430, %v2592
        %2594 = vdwg.mxu0
        %v2595 = vmax.f32 %v2453, 0.0
        %v2596 = vmax.f32 %v2473, 0.0
        %v2597 = vmax.f32 %v2493, 0.0
        %v2598 = vmax.f32 %v2513, 0.0
        %v2599 = vmax.f32 %v2533, 0.0
        %v2600 = vmax.f32 %v2553, 0.0
        %v2601 = vmax.f32 %v2573, 0.0
        %v2602 = vmax.f32 %v2593, 0.0
        %2603 = vst [vmem:[%s188] sm:$0xff] %v2595
        %2604 = vst [vmem:[%s188 + $0x8] sm:$0xff] %v2596
        %2605 = vst [vmem:[%s188 + $0x10] sm:$0xff] %v2597
        %2606 = vst [vmem:[%s188 + $0x18] sm:$0xff] %v2598
        %2607 = vst [vmem:[%s188 + $0x20] sm:$0xff] %v2599
        %2608 = vst [vmem:[%s188 + $0x28] sm:$0xff] %v2600
        %2609 = vst [vmem:[%s188 + $0x30] sm:$0xff] %v2601
        %2610 = vst [vmem:[%s188 + $0x38] sm:$0xff] %v2602
        %s2611 = sand.u32 %s109, 1
        %s2612 = scalar_lea.sflag [#allocation3], %s2611
        %s2613 = sand.u32 %s109, 1
        %s2614 = smul.addr %s2613, 64
        %s2615 = scalar_lea.vmem [#allocation2], %s2614
        // Predicated region
        $region33: #{basic_block_3.1} parent=31 // pred_check
          %p2616 = pneg %p119
        $region34: #{basic_block_3.1} parent=31 // pred_check_branch
          %2618 = sbr.rel (%p2616) target = $region36
        $region35: #{basic_block_3.1} parent=31 // pred_region
          %s2619 = smul.u32 8, %s22
          %2621 = vsyncadd %s2612, 0
          %s2622 = smul.addr %s21, 8
          %s2623 = sadd.s32 %s2619, %s2622
          %s2624 = smul.addr %s2623, 8
          %s2625 = scalar_lea.hbm %s3, %s2624
          %s2627 = sshll.u32 %s2615, 4
          %s2628 = int_to_ptr.vmem [resolvable:$true] %s2627
          %s2629 = sshll.u32 %s2625, 4
          %s2630 = int_to_ptr.hbm [resolvable:$true] %s2629
          %2632 = dma.vmem_to_hbm [thread:$0]  %s2628, 1024, %s2630, %s2612
        $region36: #{basic_block_3.1} parent=31 // pred_fallthru
          _
      $region32: #{basic_block_3.1} parent=5 // pred_fallthru
        _
      %p2633 = scmp.le.s32.totalorder 2, %s12
      // Predicated region
      $region37: #{basic_block_3.1} parent=5 // pred_check
        %p2634 = pneg %p2633
      $region38: #{basic_block_3.1} parent=5 // pred_check_branch
        %2636 = sbr.rel (%p2634) target = $region40
      $region39: #{basic_block_3.1} parent=5 // pred_region
        %s2637 = ssub.s32 %s12, 2
        // Predicated region
        $region41: #{basic_block_3.1} parent=39 // pred_check
          %p2638 = pneg %p125
        $region42: #{basic_block_3.1} parent=39 // pred_check_branch
          %2640 = sbr.rel (%p2638) target = $region44
        $region43: #{basic_block_3.1} parent=39 // pred_region
          %s2641 = sand.u32 %s110, 1
          %s2642 = scalar_lea.sflag [#allocation3], %s2641
          %s2643 = sand.u32 %s110, 1
          %s2644 = smul.addr %s2643, 64
          %s2645 = scalar_lea.vmem [#allocation2], %s2644
          %2647 = dma.done %s2642, 1024
        $region44: #{basic_block_3.1} parent=39 // pred_fallthru
          _
      $region40: #{basic_block_3.1} parent=5 // pred_fallthru
        _
    $region6: #{basic_block_3.1} parent=1 // loop_footer
      %s16 = sadd.s32 1, %s12
    $region7: #{basic_block_3.1} parent=1 // loop_footer_branch
      %11 = sbr.rel target = $region3
    $region8: #{basic_block_3.1} parent=1 // loop_exit
      _
    %2648 = vsyncpa [#allocation3], 1
    %s2649 = scalar_lea.sflag [#allocation3], 1
    %2650 = vsyncpa %s2649, 1

</llo_original>
